<compile_context>
chip_gen: v5e
topology: v5e:2x2
jax: 0.10.0
libtpu: 0.0.40
codegen_flags: <defaults>
</compile_context>

<pallas_src>
import functools
import math

import jax
import jax.numpy as jnp
from jax import lax
from jax.experimental import pallas as pl
from jax.experimental.pallas import tpu as pltpu


# -----------------------------------------------------------------------------
# In-kernel helpers (traced inside the Pallas kernel; operands are 2-D)
# -----------------------------------------------------------------------------
def _layer_norm(x, g, b, eps=1e-5):
    mu = jnp.mean(x, axis=-1, keepdims=True)
    var = jnp.mean(jnp.square(x - mu), axis=-1, keepdims=True)
    return (x - mu) * lax.rsqrt(var + eps) * g + b


def _attend(q, k, v, scale, add_mask=None):
    """q:[Lq,dh]; k,v:[Lk,dh] -> [Lq,dh].  Transpose-free contractions."""
    s = lax.dot_general(q, k, (((1,), (1,)), ((), ())),
                        preferred_element_type=jnp.float32) * scale
    if add_mask is not None:
        s = s + add_mask
    m = jnp.max(s, axis=-1, keepdims=True)
    p = jnp.exp(s - m)
    # approx reciprocal runs on the EUP slot; ~1e-3 rel. vs exact softmax.
    p = p * pl.reciprocal(jnp.sum(p, axis=-1, keepdims=True), approx=True)
    return lax.dot_general(p, v, (((1,), (0,)), ((), ())),
                           preferred_element_type=jnp.float32)


# -----------------------------------------------------------------------------
# Fused kernel: one grid step == one batch element, whole forward in VMEM.
# -----------------------------------------------------------------------------
def _fused_kernel(x_ref, xm_ref, xd_ref, ym_ref, eps_ref, pee_ref, ped_ref,
                  vae_win_ref, vae_wh_ref, vae_wlat_ref,
                  emb_w_ref, w_d_ref, w_ff_ref, bias_ref,
                  vae_out_ref, dec_out_ref,
                  *, dims, boff, woff, roff):
    c = dims["enc_in"]
    lat = dims["latent"]
    d = dims["d_model"]
    nh = dims["n_heads"]
    dh = d // nh
    scale = 1.0 / math.sqrt(dh)

    def bias(name):
        s, e = boff[name]
        return bias_ref[:, s:e]                       # [1, n] static slice

    w_d = w_d_ref[...]                                # [d, sum_cols]

    def wd(name):
        s, e = woff[name]
        return w_d[:, s:e]

    emb_w = emb_w_ref[...]                            # [sum_rows, d]

    def we(name):
        s, e = roff[name]
        return emb_w[s:e, :]

    def heads_attn(q_all, k_all, v_all, add_mask=None):
        outs = []
        for hi in range(nh):                          # n_heads=2, unrolled
            lo = hi * dh
            outs.append(_attend(q_all[:, lo:lo + dh], k_all[:, lo:lo + dh],
                                v_all[:, lo:lo + dh], scale, add_mask))
        return jnp.concatenate(outs, axis=-1)

    # ------------------------------ VAE -------------------------------------
    x = x_ref[...]                                    # [L_enc, c]
    h = jnp.maximum(
        jnp.dot(x, vae_win_ref[...], preferred_element_type=jnp.float32)
        + bias("vae_enc_b"), 0.0)
    vae_wh = vae_wh_ref[...]                          # [vh, 2*lat + c]
    mulv = (jnp.dot(h, vae_wh[:, 0:2 * lat], preferred_element_type=jnp.float32)
            + bias("vae_mulv_b"))
    mu = mulv[:, 0:lat]
    lv = mulv[:, lat:2 * lat]
    z = mu + eps_ref[...] * jnp.exp(0.5 * lv)         # reparameterization
    hd = jnp.maximum(
        jnp.dot(z, vae_wlat_ref[...], preferred_element_type=jnp.float32)
        + bias("vae_dec1_b"), 0.0)
    recon = (jnp.dot(hd, vae_wh[:, 2 * lat:2 * lat + c],
                     preferred_element_type=jnp.float32) + bias("vae_dec2_b"))
    # lane-dense packed VAE output slab: [recon | z | mu | logvar]
    vae_out_ref[...] = jnp.concatenate([recon, z, mu, lv], axis=-1)

    # --------------------------- Encoder layer ------------------------------
    # fused embedding: x@Wx + z@Wz + mark@Wt + (pe + value_b + temporal_b)
    emb = (jnp.dot(x, we("enc_val_x"), preferred_element_type=jnp.float32)
           + jnp.dot(z, we("enc_val_z"), preferred_element_type=jnp.float32)
           + jnp.dot(xm_ref[...], we("enc_tmp"), preferred_element_type=jnp.float32)
           + pee_ref[...])

    qkv = (jnp.dot(emb, wd("enc_sa_qkv"), preferred_element_type=jnp.float32)
           + bias("enc_sa_qkv_b"))
    attn = heads_attn(qkv[:, 0:d], qkv[:, d:2 * d], qkv[:, 2 * d:3 * d])
    h1 = _layer_norm(
        emb + jnp.dot(attn, wd("enc_sa_o"), preferred_element_type=jnp.float32)
        + bias("enc_sa_o_b"),
        bias("enc_ln1_g"), bias("enc_ln1_b"))
    w_ff = w_ff_ref[...]                              # [dff, 2*d]
    f = (jnp.dot(
            jnp.maximum(
                jnp.dot(h1, wd("enc_ff1"), preferred_element_type=jnp.float32)
                + bias("enc_ff1_b"), 0.0),
            w_ff[:, 0:d], preferred_element_type=jnp.float32)
         + bias("enc_ff2_b"))
    enc_out = _layer_norm(h1 + f, bias("enc_ln2_g"), bias("enc_ln2_b"))

    # --------------------------- Decoder layer ------------------------------
    xd = xd_ref[...]                                  # [L_dec, dec_in]
    embd = (jnp.dot(xd, we("dec_val"), preferred_element_type=jnp.float32)
            + jnp.dot(ym_ref[...], we("dec_tmp"), preferred_element_type=jnp.float32)
            + ped_ref[...])

    ld = embd.shape[0]
    # causal additive mask, built ONCE and reused across heads
    ri = lax.broadcasted_iota(jnp.int32, (ld, ld), 0)
    ci = lax.broadcasted_iota(jnp.int32, (ld, ld), 1)
    causal_add = jnp.where(ci <= ri, 0.0, -1e30).astype(jnp.float32)

    qkv_d = (jnp.dot(embd, wd("dec_sa_qkv"), preferred_element_type=jnp.float32)
             + bias("dec_sa_qkv_b"))
    sattn = heads_attn(qkv_d[:, 0:d], qkv_d[:, d:2 * d], qkv_d[:, 2 * d:3 * d],
                       add_mask=causal_add)
    h1d = _layer_norm(
        embd + jnp.dot(sattn, wd("dec_sa_o"), preferred_element_type=jnp.float32)
        + bias("dec_sa_o_b"),
        bias("dec_ln1_g"), bias("dec_ln1_b"))

    # cross-attention over the in-VMEM encoder output (fused KV projection)
    q_ca = (jnp.dot(h1d, wd("dec_ca_q"), preferred_element_type=jnp.float32)
            + bias("dec_ca_q_b"))
    kv_ca = (jnp.dot(enc_out, wd("dec_ca_kv"), preferred_element_type=jnp.float32)
             + bias("dec_ca_kv_b"))
    cattn = heads_attn(q_ca, kv_ca[:, 0:d], kv_ca[:, d:2 * d])
    h2d = _layer_norm(
        h1d + jnp.dot(cattn, wd("dec_ca_o"), preferred_element_type=jnp.float32)
        + bias("dec_ca_o_b"),
        bias("dec_ln2_g"), bias("dec_ln2_b"))

    fd = (jnp.dot(
            jnp.maximum(
                jnp.dot(h2d, wd("dec_ff1"), preferred_element_type=jnp.float32)
                + bias("dec_ff1_b"), 0.0),
            w_ff[:, d:2 * d], preferred_element_type=jnp.float32)
          + bias("dec_ff2_b"))
    h3d = _layer_norm(h2d + fd, bias("dec_ln3_g"), bias("dec_ln3_b"))

    dec_out_ref[...] = (jnp.dot(h3d, wd("proj"), preferred_element_type=jnp.float32)
                        + bias("proj_b"))


# -----------------------------------------------------------------------------
# Wrapper: ONE pallas_call per forward pass.
# -----------------------------------------------------------------------------
def vae_transformer_forward(arrs, meta, cfg, batch_x, batch_x_mark,
                            dec_inp, batch_y_mark, eps):
    b, l_enc, c = batch_x.shape
    _, l_dec, cdin = dec_inp.shape
    lat = cfg["latent"]
    d = cfg["d_model"]
    dff = cfg["d_ff"]
    nh = cfg["n_heads"]
    c_out = cfg["c_out"]
    vh = cfg["vae_hidden"]
    mk = batch_x_mark.shape[-1]
    dh = d // nh
    f32 = jnp.float32

    dims = dict(enc_in=c, latent=lat, d_model=d, n_heads=nh)

    operands = (
        batch_x.astype(f32), batch_x_mark.astype(f32),
        dec_inp.astype(f32), batch_y_mark.astype(f32), eps.astype(f32),
        arrs["pe_enc"], arrs["pe_dec"],
        arrs["vae_w_in"], arrs["vae_w_h"], arrs["vae_w_lat"],
        arrs["emb_w"], arrs["w_d"], arrs["w_ff"], arrs["bias_all"],
    )

    def batch_spec(seq, ch):
        return pl.BlockSpec((None, seq, ch), lambda bb: (bb, 0, 0))

    def full_spec(arr):
        return pl.BlockSpec(arr.shape, lambda bb, _nd=arr.ndim: (0,) * _nd)

    in_specs = [
        batch_spec(l_enc, c), batch_spec(l_enc, mk),
        batch_spec(l_dec, cdin), batch_spec(l_dec, mk),
        batch_spec(l_enc, lat),
        full_spec(arrs["pe_enc"]), full_spec(arrs["pe_dec"]),
        full_spec(arrs["vae_w_in"]), full_spec(arrs["vae_w_h"]),
        full_spec(arrs["vae_w_lat"]),
        full_spec(arrs["emb_w"]), full_spec(arrs["w_d"]),
        full_spec(arrs["w_ff"]), full_spec(arrs["bias_all"]),
    ]
    out_specs = (batch_spec(l_enc, c + 3 * lat), batch_spec(l_dec, c_out))
    out_shape = (jax.ShapeDtypeStruct((b, l_enc, c + 3 * lat), f32),
                 jax.ShapeDtypeStruct((b, l_dec, c_out), f32))

    # advisory cost hint
    att_flops = 4 * nh * dh * (l_enc * l_enc + l_dec * l_dec + l_dec * l_enc)
    mm_flops = 2 * (
        l_enc * (c * vh + vh * 2 * lat + lat * vh + vh * c)
        + l_enc * ((c + lat + mk) * d + 3 * d * d + d * d + 2 * d * dff)
        + l_dec * ((cdin + mk) * d + 3 * d * d + 3 * d * d + 2 * d * dff + d * c_out)
        + l_enc * (2 * d * d))
    flops = b * (mm_flops + att_flops)
    transc = b * (l_enc * lat
                  + nh * (l_enc * l_enc + l_dec * l_dec + l_dec * l_enc)
                  + 3 * (l_enc + l_dec))
    bytes_acc = (sum(int(o.size) * 4 for o in operands)
                 + 4 * b * (l_enc * (c + 3 * lat) + l_dec * c_out))
    cost = pl.CostEstimate(flops=int(flops), transcendentals=int(transc),
                           bytes_accessed=int(bytes_acc))

    vae_slab, dec_full = pl.pallas_call(
        functools.partial(_fused_kernel, dims=dims, boff=meta["boff"],
                          woff=meta["woff"], roff=meta["roff"]),
        grid=(b,),
        in_specs=in_specs,
        out_specs=out_specs,
        out_shape=out_shape,
        compiler_params=pltpu.CompilerParams(
            dimension_semantics=("parallel",)),
        cost_estimate=cost,
    )(*operands)

    recon = vae_slab[..., 0:c]
    z = vae_slab[..., c:c + lat]
    mu = vae_slab[..., c + lat:c + 2 * lat]
    lv = vae_slab[..., c + 2 * lat:c + 3 * lat]
    out_var = (recon, z, mu, lv)
    out_transformer = dec_full[:, -cfg["pred_len"]:, :]
    return out_var, out_transformer


# -----------------------------------------------------------------------------
# Positional encoding (precomputed once at init)
# -----------------------------------------------------------------------------
def positional_encoding(length, d_model):
    pos = jnp.arange(length, dtype=jnp.float32)[:, None]
    i = jnp.arange(0, d_model, 2, dtype=jnp.float32)
    div = jnp.exp(-math.log(10000.0) * i / d_model)
    pe = jnp.zeros((length, d_model), jnp.float32)
    pe = pe.at[:, 0::2].set(jnp.sin(pos * div))
    pe = pe.at[:, 1::2].set(jnp.cos(pos * div))
    return pe


# -----------------------------------------------------------------------------
# Parameter init (reference layout) + packing into lane-dense slabs
# -----------------------------------------------------------------------------
def init_params(key, cfg):
    p = {}

    def dense(name, fan_in, fan_out):
        nonlocal key
        key, sub = jax.random.split(key)
        p[name + "_w"] = 0.05 * jax.random.normal(sub, (fan_in, fan_out), jnp.float32)
        p[name + "_b"] = jnp.zeros((fan_out,), jnp.float32)

    def ln(name, dim):
        p[name + "_g"] = jnp.ones((dim,), jnp.float32)
        p[name + "_b"] = jnp.zeros((dim,), jnp.float32)

    c, lat, vh = cfg["enc_in"], cfg["latent"], cfg["vae_hidden"]
    d, dff, mk = cfg["d_model"], cfg["d_ff"], cfg["mark_dim"]

    # VAE
    dense("vae_enc", c, vh)
    dense("vae_mu", vh, lat)
    dense("vae_lv", vh, lat)
    dense("vae_dec1", lat, vh)
    dense("vae_dec2", vh, c)
    # Embeddings
    dense("enc_val", c + lat, d)
    dense("enc_tmp", mk, d)
    dense("dec_val", cfg["dec_in"], d)
    dense("dec_tmp", mk, d)
    # Encoder layer (fused QKV)
    dense("enc_sa_qkv", d, 3 * d)
    dense("enc_sa_o", d, d)
    ln("enc_ln1", d)
    dense("enc_ff1", d, dff)
    dense("enc_ff2", dff, d)
    ln("enc_ln2", d)
    # Decoder layer (fused QKV / fused KV for cross-attention)
    dense("dec_sa_qkv", d, 3 * d)
    dense("dec_sa_o", d, d)
    ln("dec_ln1", d)
    dense("dec_ca_q", d, d)
    dense("dec_ca_kv", d, 2 * d)
    dense("dec_ca_o", d, d)
    ln("dec_ln2", d)
    dense("dec_ff1", d, dff)
    dense("dec_ff2", dff, d)
    ln("dec_ln3", d)
    # Output projection
    dense("proj", d, cfg["c_out"])
    # Positional encodings
    p["pe_enc"] = positional_encoding(cfg["seq_len"], d)
    p["pe_dec"] = positional_encoding(cfg["label_len"] + cfg["pred_len"], d)
    return p


def pack_params(p, cfg):
    """Pack all params into a few lane-dense slabs + static offset tables."""
    c = cfg["enc_in"]
    f32 = jnp.float32

    def pack_1d(entries):
        offs, parts, off = {}, [], 0
        for name, v in entries:
            n = int(v.shape[0])
            offs[name] = (off, off + n)
            parts.append(v.astype(f32))
            off += n
        return jnp.concatenate(parts).reshape(1, -1), offs

    def pack_cols(entries):
        offs, parts, off = {}, [], 0
        for name, w in entries:
            n = int(w.shape[1])
            offs[name] = (off, off + n)
            parts.append(w.astype(f32))
            off += n
        return jnp.concatenate(parts, axis=1), offs

    def pack_rows(entries):
        offs, parts, off = {}, [], 0
        for name, w in entries:
            n = int(w.shape[0])
            offs[name] = (off, off + n)
            parts.append(w.astype(f32))
            off += n
        return jnp.concatenate(parts, axis=0), offs

    bias_all, boff = pack_1d([
        ("vae_enc_b", p["vae_enc_b"]),
        ("vae_mulv_b", jnp.concatenate([p["vae_mu_b"], p["vae_lv_b"]])),
        ("vae_dec1_b", p["vae_dec1_b"]),
        ("vae_dec2_b", p["vae_dec2_b"]),
        ("enc_sa_qkv_b", p["enc_sa_qkv_b"]),
        ("enc_sa_o_b", p["enc_sa_o_b"]),
        ("enc_ln1_g", p["enc_ln1_g"]), ("enc_ln1_b", p["enc_ln1_b"]),
        ("enc_ff1_b", p["enc_ff1_b"]), ("enc_ff2_b", p["enc_ff2_b"]),
        ("enc_ln2_g", p["enc_ln2_g"]), ("enc_ln2_b", p["enc_ln2_b"]),
        ("dec_sa_qkv_b", p["dec_sa_qkv_b"]),
        ("dec_sa_o_b", p["dec_sa_o_b"]),
        ("dec_ln1_g", p["dec_ln1_g"]), ("dec_ln1_b", p["dec_ln1_b"]),
        ("dec_ca_q_b", p["dec_ca_q_b"]),
        ("dec_ca_kv_b", p["dec_ca_kv_b"]),
        ("dec_ca_o_b", p["dec_ca_o_b"]),
        ("dec_ln2_g", p["dec_ln2_g"]), ("dec_ln2_b", p["dec_ln2_b"]),
        ("dec_ff1_b", p["dec_ff1_b"]), ("dec_ff2_b", p["dec_ff2_b"]),
        ("dec_ln3_g", p["dec_ln3_g"]), ("dec_ln3_b", p["dec_ln3_b"]),
        ("proj_b", p["proj_b"]),
    ])

    w_d, woff = pack_cols([
        ("enc_sa_qkv", p["enc_sa_qkv_w"]), ("enc_sa_o", p["enc_sa_o_w"]),
        ("enc_ff1", p["enc_ff1_w"]),
        ("dec_sa_qkv", p["dec_sa_qkv_w"]), ("dec_sa_o", p["dec_sa_o_w"]),
        ("dec_ca_q", p["dec_ca_q_w"]), ("dec_ca_kv", p["dec_ca_kv_w"]),
        ("dec_ca_o", p["dec_ca_o_w"]), ("dec_ff1", p["dec_ff1_w"]),
        ("proj", p["proj_w"]),
    ])

    emb_w, roff = pack_rows([
        ("enc_val_x", p["enc_val_w"][:c]),      # x part of value embedding
        ("enc_val_z", p["enc_val_w"][c:]),      # z part of value embedding
        ("dec_val", p["dec_val_w"]),
        ("enc_tmp", p["enc_tmp_w"]),
        ("dec_tmp", p["dec_tmp_w"]),
    ])

    arrs = dict(
        vae_w_in=p["vae_enc_w"].astype(f32),
        vae_w_h=jnp.concatenate(
            [p["vae_mu_w"], p["vae_lv_w"], p["vae_dec2_w"]], axis=1).astype(f32),
        vae_w_lat=p["vae_dec1_w"].astype(f32),
        emb_w=emb_w, w_d=w_d,
        w_ff=jnp.concatenate([p["enc_ff2_w"], p["dec_ff2_w"]], axis=1).astype(f32),
        bias_all=bias_all,
        # fold the embedding biases into the PE once at init
        pe_enc=(p["pe_enc"] + p["enc_val_b"][None, :] + p["enc_tmp_b"][None, :]).astype(f32),
        pe_dec=(p["pe_dec"] + p["dec_val_b"][None, :] + p["dec_tmp_b"][None, :]).astype(f32),
    )
    meta = dict(boff=boff, woff=woff, roff=roff)
    return arrs, meta


# -----------------------------------------------------------------------------
# Main
# -----------------------------------------------------------------------------
if __name__ == "__main__":
    cfg = dict(
        enc_in=4, dec_in=4, c_out=4, mark_dim=4,
        seq_len=8, label_len=4, pred_len=4,
        d_model=32, n_heads=2, d_ff=64,
        vae_hidden=16, latent=4,
    )
    B = 2
    L_enc = cfg["seq_len"]
    L_dec = cfg["label_len"] + cfg["pred_len"]

    key = jax.random.PRNGKey(0)
    key, k1, k2, k3, k4, k5, kp = jax.random.split(key, 7)
    batch_x = jax.random.normal(k1, (B, L_enc, cfg["enc_in"]), jnp.float32)
    batch_x_mark = jax.random.normal(k2, (B, L_enc, cfg["mark_dim"]), jnp.float32)
    dec_inp = jax.random.normal(k3, (B, L_dec, cfg["dec_in"]), jnp.float32)
    batch_y_mark = jax.random.normal(k4, (B, L_dec, cfg["mark_dim"]), jnp.float32)
    # TODO(synk): torch.randn_like inside the VAE reparameterization is replaced
    # by a deterministic pre-sampled eps (no stateful RNG inside the module).
    eps = jax.random.normal(k5, (B, L_enc, cfg["latent"]), jnp.float32)

    raw_params = init_params(kp, cfg)
    arrs, meta = pack_params(raw_params, cfg)

    fwd = jax.jit(lambda a, bx, bxm, di, bym, e:
                  vae_transformer_forward(a, meta, cfg, bx, bxm, di, bym, e))

    out_var, out_transformer = fwd(arrs, batch_x, batch_x_mark,
                                   dec_inp, batch_y_mark, eps)
    jax.block_until_ready((out_var, out_transformer))

    assert out_var[0].shape == (B, L_enc, cfg["enc_in"])
    assert out_var[1].shape == (B, L_enc, cfg["latent"])
    assert out_var[2].shape == (B, L_enc, cfg["latent"])
    assert out_var[3].shape == (B, L_enc, cfg["latent"])
    assert out_transformer.shape == (B, cfg["pred_len"], cfg["c_out"])
    print("KERNEL_OK")
</pallas_src>

<mosaic_0001>
module attributes {stable_mosaic.version = 11 : i64} {
  func.func @_fused_kernel(%arg0: i32, %arg1: memref<1x8x4xf32, #tpu.memory_space<vmem>>, %arg2: memref<1x8x4xf32, #tpu.memory_space<vmem>>, %arg3: memref<1x8x4xf32, #tpu.memory_space<vmem>>, %arg4: memref<1x8x4xf32, #tpu.memory_space<vmem>>, %arg5: memref<1x8x4xf32, #tpu.memory_space<vmem>>, %arg6: memref<8x32xf32, #tpu.memory_space<vmem>>, %arg7: memref<8x32xf32, #tpu.memory_space<vmem>>, %arg8: memref<4x16xf32, #tpu.memory_space<vmem>>, %arg9: memref<16x12xf32, #tpu.memory_space<vmem>>, %arg10: memref<4x16xf32, #tpu.memory_space<vmem>>, %arg11: memref<20x32xf32, #tpu.memory_space<vmem>>, %arg12: memref<32x516xf32, #tpu.memory_space<vmem>>, %arg13: memref<64x64xf32, #tpu.memory_space<vmem>>, %arg14: memref<1x944xf32, #tpu.memory_space<vmem>>, %arg15: memref<1x8x16xf32, #tpu.memory_space<vmem>>, %arg16: memref<1x8x4xf32, #tpu.memory_space<vmem>>) attributes {dimension_semantics = [#tpu.dimension_semantics<parallel>], iteration_bounds = array<i64: 2>, scalar_prefetch = 0 : i64, scratch_operands = 0 : i64, tpu.core_type = #tpu.core_type<tc>, window_params = [{transform_indices = @transform_0, window_bounds = array<i64: 1, 8, 4>}, {transform_indices = @transform_1, window_bounds = array<i64: 1, 8, 4>}, {transform_indices = @transform_2, window_bounds = array<i64: 1, 8, 4>}, {transform_indices = @transform_3, window_bounds = array<i64: 1, 8, 4>}, {transform_indices = @transform_4, window_bounds = array<i64: 1, 8, 4>}, {pipeline_mode = #tpu.pipeline_mode<synchronous>, transform_indices = @transform_5, window_bounds = array<i64: 8, 32>}, {pipeline_mode = #tpu.pipeline_mode<synchronous>, transform_indices = @transform_6, window_bounds = array<i64: 8, 32>}, {pipeline_mode = #tpu.pipeline_mode<synchronous>, transform_indices = @transform_7, window_bounds = array<i64: 4, 16>}, {pipeline_mode = #tpu.pipeline_mode<synchronous>, transform_indices = @transform_8, window_bounds = array<i64: 16, 12>}, {pipeline_mode = #tpu.pipeline_mode<synchronous>, transform_indices = @transform_9, window_bounds = array<i64: 4, 16>}, {pipeline_mode = #tpu.pipeline_mode<synchronous>, transform_indices = @transform_10, window_bounds = array<i64: 20, 32>}, {pipeline_mode = #tpu.pipeline_mode<synchronous>, transform_indices = @transform_11, window_bounds = array<i64: 32, 516>}, {pipeline_mode = #tpu.pipeline_mode<synchronous>, transform_indices = @transform_12, window_bounds = array<i64: 64, 64>}, {pipeline_mode = #tpu.pipeline_mode<synchronous>, transform_indices = @transform_13, window_bounds = array<i64: 1, 944>}, {transform_indices = @transform_14, window_bounds = array<i64: 1, 8, 16>}, {transform_indices = @transform_15, window_bounds = array<i64: 1, 8, 4>}]} {
    %c0 = arith.constant 0 : index
    %c0_0 = arith.constant 0 : index
    %0 = vector.load %arg12[%c0, %c0_0] : memref<32x516xf32, #tpu.memory_space<vmem>>, vector<32x516xf32>
    %c0_1 = arith.constant 0 : index
    %c0_2 = arith.constant 0 : index
    %1 = vector.load %arg11[%c0_1, %c0_2] : memref<20x32xf32, #tpu.memory_space<vmem>>, vector<20x32xf32>
    %c0_3 = arith.constant 0 : index
    %c0_4 = arith.constant 0 : index
    %c0_5 = arith.constant 0 : index
    %2 = vector.load %arg1[%c0_3, %c0_4, %c0_5] : memref<1x8x4xf32, #tpu.memory_space<vmem>>, vector<1x8x4xf32>
    %3 = vector.shape_cast %2 : vector<1x8x4xf32> to vector<8x4xf32>
    %c0_6 = arith.constant 0 : index
    %c0_7 = arith.constant 0 : index
    %4 = vector.load %arg8[%c0_6, %c0_7] : memref<4x16xf32, #tpu.memory_space<vmem>>, vector<4x16xf32>
    %cst = arith.constant dense<0.000000e+00> : vector<8x16xf32>
    %5 = tpu.matmul %3, %4, %cst {dimension_numbers = #tpu.dot_dimension_numbers<[1], [0], [0], [1], [0, 0, 1, 1], [], []>} : vector<8x4xf32>, vector<4x16xf32>, vector<8x16xf32> -> vector<8x16xf32>
    %c0_8 = arith.constant 0 : index
    %c0_9 = arith.constant 0 : index
    %6 = vector.load %arg14[%c0_8, %c0_9] : memref<1x944xf32, #tpu.memory_space<vmem>>, vector<1x16xf32>
    %7 = vector.broadcast %6 : vector<1x16xf32> to vector<8x16xf32>
    %8 = arith.addf %5, %7 : vector<8x16xf32>
    %cst_10 = arith.constant 0.000000e+00 : f32
    %9 = vector.broadcast %cst_10 : f32 to vector<8x16xf32>
    %10 = arith.maximumf %8, %9 : vector<8x16xf32>
    %c0_11 = arith.constant 0 : index
    %c0_12 = arith.constant 0 : index
    %11 = vector.load %arg9[%c0_11, %c0_12] : memref<16x12xf32, #tpu.memory_space<vmem>>, vector<16x12xf32>
    %12 = vector.extract_strided_slice %11 {offsets = [0, 0], sizes = [16, 8], strides = [1, 1]} : vector<16x12xf32> to vector<16x8xf32>
    %cst_13 = arith.constant dense<0.000000e+00> : vector<8x8xf32>
    %13 = tpu.matmul %10, %12, %cst_13 {dimension_numbers = #tpu.dot_dimension_numbers<[1], [0], [0], [1], [0, 0, 1, 1], [], []>} : vector<8x16xf32>, vector<16x8xf32>, vector<8x8xf32> -> vector<8x8xf32>
    %c0_14 = arith.constant 0 : index
    %c16 = arith.constant 16 : index
    %14 = vector.load %arg14[%c0_14, %c16] : memref<1x944xf32, #tpu.memory_space<vmem>>, vector<1x8xf32>
    %15 = vector.broadcast %14 : vector<1x8xf32> to vector<8x8xf32>
    %16 = arith.addf %13, %15 : vector<8x8xf32>
    %17 = vector.extract_strided_slice %16 {offsets = [0, 0], sizes = [8, 4], strides = [1, 1]} : vector<8x8xf32> to vector<8x4xf32>
    %18 = vector.extract_strided_slice %16 {offsets = [0, 4], sizes = [8, 4], strides = [1, 1]} : vector<8x8xf32> to vector<8x4xf32>
    %c0_15 = arith.constant 0 : index
    %c0_16 = arith.constant 0 : index
    %c0_17 = arith.constant 0 : index
    %19 = vector.load %arg5[%c0_15, %c0_16, %c0_17] : memref<1x8x4xf32, #tpu.memory_space<vmem>>, vector<1x8x4xf32>
    %20 = vector.shape_cast %19 : vector<1x8x4xf32> to vector<8x4xf32>
    %cst_18 = arith.constant 5.000000e-01 : f32
    %21 = vector.broadcast %cst_18 : f32 to vector<8x4xf32>
    %22 = arith.mulf %21, %18 : vector<8x4xf32>
    %23 = math.exp %22 : vector<8x4xf32>
    %24 = arith.mulf %20, %23 : vector<8x4xf32>
    %25 = arith.addf %17, %24 : vector<8x4xf32>
    %c0_19 = arith.constant 0 : index
    %c0_20 = arith.constant 0 : index
    %26 = vector.load %arg10[%c0_19, %c0_20] : memref<4x16xf32, #tpu.memory_space<vmem>>, vector<4x16xf32>
    %cst_21 = arith.constant dense<0.000000e+00> : vector<8x16xf32>
    %27 = tpu.matmul %25, %26, %cst_21 {dimension_numbers = #tpu.dot_dimension_numbers<[1], [0], [0], [1], [0, 0, 1, 1], [], []>} : vector<8x4xf32>, vector<4x16xf32>, vector<8x16xf32> -> vector<8x16xf32>
    %c0_22 = arith.constant 0 : index
    %c24 = arith.constant 24 : index
    %28 = vector.load %arg14[%c0_22, %c24] : memref<1x944xf32, #tpu.memory_space<vmem>>, vector<1x16xf32>
    %29 = vector.broadcast %28 : vector<1x16xf32> to vector<8x16xf32>
    %30 = arith.addf %27, %29 : vector<8x16xf32>
    %cst_23 = arith.constant 0.000000e+00 : f32
    %31 = vector.broadcast %cst_23 : f32 to vector<8x16xf32>
    %32 = arith.maximumf %30, %31 : vector<8x16xf32>
    %33 = vector.extract_strided_slice %11 {offsets = [0, 8], sizes = [16, 4], strides = [1, 1]} : vector<16x12xf32> to vector<16x4xf32>
    %cst_24 = arith.constant dense<0.000000e+00> : vector<8x4xf32>
    %34 = tpu.matmul %32, %33, %cst_24 {dimension_numbers = #tpu.dot_dimension_numbers<[1], [0], [0], [1], [0, 0, 1, 1], [], []>} : vector<8x16xf32>, vector<16x4xf32>, vector<8x4xf32> -> vector<8x4xf32>
    %c0_25 = arith.constant 0 : index
    %c40 = arith.constant 40 : index
    %35 = vector.load %arg14[%c0_25, %c40] : memref<1x944xf32, #tpu.memory_space<vmem>>, vector<1x4xf32>
    %36 = vector.broadcast %35 : vector<1x4xf32> to vector<8x4xf32>
    %37 = arith.addf %34, %36 : vector<8x4xf32>
    %38 = tpu.concatenate %37, %25, %17, %18 in 1 : vector<8x4xf32>, vector<8x4xf32>, vector<8x4xf32>, vector<8x4xf32> -> vector<8x16xf32>
    %c0_26 = arith.constant 0 : index
    %c0_27 = arith.constant 0 : index
    %c0_28 = arith.constant 0 : index
    %39 = vector.load %arg15[%c0_26, %c0_27, %c0_28] : memref<1x8x16xf32, #tpu.memory_space<vmem>>, vector<1x8x16xf32>
    %40 = vector.shape_cast %39 : vector<1x8x16xf32> to vector<8x16xf32>
    %41 = vector.shape_cast %38 : vector<8x16xf32> to vector<1x8x16xf32>
    tpu.vector_store %arg15[%c0_26, %c0_27, %c0_28], %41 {strides = array<i32>} : memref<1x8x16xf32, #tpu.memory_space<vmem>>, vector<1x8x16xf32>,
    %42 = vector.extract_strided_slice %1 {offsets = [0, 0], sizes = [4, 32], strides = [1, 1]} : vector<20x32xf32> to vector<4x32xf32>
    %cst_29 = arith.constant dense<0.000000e+00> : vector<8x32xf32>
    %43 = tpu.matmul %3, %42, %cst_29 {dimension_numbers = #tpu.dot_dimension_numbers<[1], [0], [0], [1], [0, 0, 1, 1], [], []>} : vector<8x4xf32>, vector<4x32xf32>, vector<8x32xf32> -> vector<8x32xf32>
    %44 = vector.extract_strided_slice %1 {offsets = [4, 0], sizes = [4, 32], strides = [1, 1]} : vector<20x32xf32> to vector<4x32xf32>
    %cst_30 = arith.constant dense<0.000000e+00> : vector<8x32xf32>
    %45 = tpu.matmul %25, %44, %cst_30 {dimension_numbers = #tpu.dot_dimension_numbers<[1], [0], [0], [1], [0, 0, 1, 1], [], []>} : vector<8x4xf32>, vector<4x32xf32>, vector<8x32xf32> -> vector<8x32xf32>
    %46 = arith.addf %43, %45 : vector<8x32xf32>
    %c0_31 = arith.constant 0 : index
    %c0_32 = arith.constant 0 : index
    %c0_33 = arith.constant 0 : index
    %47 = vector.load %arg2[%c0_31, %c0_32, %c0_33] : memref<1x8x4xf32, #tpu.memory_space<vmem>>, vector<1x8x4xf32>
    %48 = vector.shape_cast %47 : vector<1x8x4xf32> to vector<8x4xf32>
    %49 = vector.extract_strided_slice %1 {offsets = [12, 0], sizes = [4, 32], strides = [1, 1]} : vector<20x32xf32> to vector<4x32xf32>
    %cst_34 = arith.constant dense<0.000000e+00> : vector<8x32xf32>
    %50 = tpu.matmul %48, %49, %cst_34 {dimension_numbers = #tpu.dot_dimension_numbers<[1], [0], [0], [1], [0, 0, 1, 1], [], []>} : vector<8x4xf32>, vector<4x32xf32>, vector<8x32xf32> -> vector<8x32xf32>
    %51 = arith.addf %46, %50 : vector<8x32xf32>
    %c0_35 = arith.constant 0 : index
    %c0_36 = arith.constant 0 : index
    %52 = vector.load %arg6[%c0_35, %c0_36] : memref<8x32xf32, #tpu.memory_space<vmem>>, vector<8x32xf32>
    %53 = arith.addf %51, %52 : vector<8x32xf32>
    %54 = vector.extract_strided_slice %0 {offsets = [0, 0], sizes = [32, 96], strides = [1, 1]} : vector<32x516xf32> to vector<32x96xf32>
    %cst_37 = arith.constant dense<0.000000e+00> : vector<8x96xf32>
    %55 = tpu.matmul %53, %54, %cst_37 {dimension_numbers = #tpu.dot_dimension_numbers<[1], [0], [0], [1], [0, 0, 1, 1], [], []>} : vector<8x32xf32>, vector<32x96xf32>, vector<8x96xf32> -> vector<8x96xf32>
    %c0_38 = arith.constant 0 : index
    %c44 = arith.constant 44 : index
    %56 = vector.load %arg14[%c0_38, %c44] : memref<1x944xf32, #tpu.memory_space<vmem>>, vector<1x96xf32>
    %57 = vector.broadcast %56 : vector<1x96xf32> to vector<8x96xf32>
    %58 = arith.addf %55, %57 : vector<8x96xf32>
    %59 = vector.extract_strided_slice %58 {offsets = [0, 0], sizes = [8, 32], strides = [1, 1]} : vector<8x96xf32> to vector<8x32xf32>
    %60 = vector.extract_strided_slice %58 {offsets = [0, 32], sizes = [8, 32], strides = [1, 1]} : vector<8x96xf32> to vector<8x32xf32>
    %61 = vector.extract_strided_slice %58 {offsets = [0, 64], sizes = [8, 32], strides = [1, 1]} : vector<8x96xf32> to vector<8x32xf32>
    %62 = vector.extract_strided_slice %59 {offsets = [0, 0], sizes = [8, 16], strides = [1, 1]} : vector<8x32xf32> to vector<8x16xf32>
    %63 = vector.extract_strided_slice %60 {offsets = [0, 0], sizes = [8, 16], strides = [1, 1]} : vector<8x32xf32> to vector<8x16xf32>
    %64 = vector.extract_strided_slice %61 {offsets = [0, 0], sizes = [8, 16], strides = [1, 1]} : vector<8x32xf32> to vector<8x16xf32>
    %cst_39 = arith.constant dense<0.000000e+00> : vector<8x8xf32>
    %65 = tpu.matmul %62, %63, %cst_39 {dimension_numbers = #tpu.dot_dimension_numbers<[1], [1], [0], [0], [0, 0, 1, 0], [], []>} : vector<8x16xf32>, vector<8x16xf32>, vector<8x8xf32> -> vector<8x8xf32>
    %cst_40 = arith.constant 2.500000e-01 : f32
    %66 = vector.broadcast %cst_40 : f32 to vector<8x8xf32>
    %67 = arith.mulf %65, %66 : vector<8x8xf32>
    %cst_41 = arith.constant dense<0xFF800000> : vector<8xf32>
    %68 = vector.multi_reduction <maximumf>, %67, %cst_41 [1] : vector<8x8xf32> to vector<8xf32>
    %69 = vector.shape_cast %68 : vector<8xf32> to vector<8x1xf32>
    %70 = vector.broadcast %69 : vector<8x1xf32> to vector<8x8xf32>
    %71 = arith.subf %67, %70 : vector<8x8xf32>
    %72 = math.exp %71 : vector<8x8xf32>
    %cst_42 = arith.constant dense<0.000000e+00> : vector<8xf32>
    %73 = vector.multi_reduction <add>, %72, %cst_42 [1] : vector<8x8xf32> to vector<8xf32>
    %74 = vector.shape_cast %73 : vector<8xf32> to vector<8x1xf32>
    %75 = tpu.reciprocal %74 {approx = true} : vector<8x1xf32> -> vector<8x1xf32>
    %76 = vector.broadcast %75 : vector<8x1xf32> to vector<8x8xf32>
    %77 = arith.mulf %72, %76 : vector<8x8xf32>
    %cst_43 = arith.constant dense<0.000000e+00> : vector<8x16xf32>
    %78 = tpu.matmul %77, %64, %cst_43 {dimension_numbers = #tpu.dot_dimension_numbers<[1], [0], [0], [1], [0, 0, 1, 1], [], []>} : vector<8x8xf32>, vector<8x16xf32>, vector<8x16xf32> -> vector<8x16xf32>
    %79 = vector.extract_strided_slice %59 {offsets = [0, 16], sizes = [8, 16], strides = [1, 1]} : vector<8x32xf32> to vector<8x16xf32>
    %80 = vector.extract_strided_slice %60 {offsets = [0, 16], sizes = [8, 16], strides = [1, 1]} : vector<8x32xf32> to vector<8x16xf32>
    %81 = vector.extract_strided_slice %61 {offsets = [0, 16], sizes = [8, 16], strides = [1, 1]} : vector<8x32xf32> to vector<8x16xf32>
    %cst_44 = arith.constant dense<0.000000e+00> : vector<8x8xf32>
    %82 = tpu.matmul %79, %80, %cst_44 {dimension_numbers = #tpu.dot_dimension_numbers<[1], [1], [0], [0], [0, 0, 1, 0], [], []>} : vector<8x16xf32>, vector<8x16xf32>, vector<8x8xf32> -> vector<8x8xf32>
    %cst_45 = arith.constant 2.500000e-01 : f32
    %83 = vector.broadcast %cst_45 : f32 to vector<8x8xf32>
    %84 = arith.mulf %82, %83 : vector<8x8xf32>
    %cst_46 = arith.constant dense<0xFF800000> : vector<8xf32>
    %85 = vector.multi_reduction <maximumf>, %84, %cst_46 [1] : vector<8x8xf32> to vector<8xf32>
    %86 = vector.shape_cast %85 : vector<8xf32> to vector<8x1xf32>
    %87 = vector.broadcast %86 : vector<8x1xf32> to vector<8x8xf32>
    %88 = arith.subf %84, %87 : vector<8x8xf32>
    %89 = math.exp %88 : vector<8x8xf32>
    %cst_47 = arith.constant dense<0.000000e+00> : vector<8xf32>
    %90 = vector.multi_reduction <add>, %89, %cst_47 [1] : vector<8x8xf32> to vector<8xf32>
    %91 = vector.shape_cast %90 : vector<8xf32> to vector<8x1xf32>
    %92 = tpu.reciprocal %91 {approx = true} : vector<8x1xf32> -> vector<8x1xf32>
    %93 = vector.broadcast %92 : vector<8x1xf32> to vector<8x8xf32>
    %94 = arith.mulf %89, %93 : vector<8x8xf32>
    %cst_48 = arith.constant dense<0.000000e+00> : vector<8x16xf32>
    %95 = tpu.matmul %94, %81, %cst_48 {dimension_numbers = #tpu.dot_dimension_numbers<[1], [0], [0], [1], [0, 0, 1, 1], [], []>} : vector<8x8xf32>, vector<8x16xf32>, vector<8x16xf32> -> vector<8x16xf32>
    %96 = tpu.concatenate %78, %95 in 1 : vector<8x16xf32>, vector<8x16xf32> -> vector<8x32xf32>
    %97 = vector.extract_strided_slice %0 {offsets = [0, 96], sizes = [32, 32], strides = [1, 1]} : vector<32x516xf32> to vector<32x32xf32>
    %cst_49 = arith.constant dense<0.000000e+00> : vector<8x32xf32>
    %98 = tpu.matmul %96, %97, %cst_49 {dimension_numbers = #tpu.dot_dimension_numbers<[1], [0], [0], [1], [0, 0, 1, 1], [], []>} : vector<8x32xf32>, vector<32x32xf32>, vector<8x32xf32> -> vector<8x32xf32>
    %99 = arith.addf %53, %98 : vector<8x32xf32>
    %c0_50 = arith.constant 0 : index
    %c140 = arith.constant 140 : index
    %100 = vector.load %arg14[%c0_50, %c140] : memref<1x944xf32, #tpu.memory_space<vmem>>, vector<1x32xf32>
    %101 = vector.broadcast %100 : vector<1x32xf32> to vector<8x32xf32>
    %102 = arith.addf %99, %101 : vector<8x32xf32>
    %c0_51 = arith.constant 0 : index
    %c172 = arith.constant 172 : index
    %103 = vector.load %arg14[%c0_51, %c172] : memref<1x944xf32, #tpu.memory_space<vmem>>, vector<1x32xf32>
    %c0_52 = arith.constant 0 : index
    %c204 = arith.constant 204 : index
    %104 = vector.load %arg14[%c0_52, %c204] : memref<1x944xf32, #tpu.memory_space<vmem>>, vector<1x32xf32>
    %cst_53 = arith.constant dense<0.000000e+00> : vector<8xf32>
    %105 = vector.multi_reduction <add>, %102, %cst_53 [1] : vector<8x32xf32> to vector<8xf32>
    %106 = vector.shape_cast %105 : vector<8xf32> to vector<8x1xf32>
    %cst_54 = arith.constant 3.200000e+01 : f32
    %107 = vector.broadcast %cst_54 : f32 to vector<8x1xf32>
    %108 = arith.divf %106, %107 : vector<8x1xf32>
    %109 = vector.broadcast %108 : vector<8x1xf32> to vector<8x32xf32>
    %110 = arith.subf %102, %109 : vector<8x32xf32>
    %111 = arith.mulf %110, %110 : vector<8x32xf32>
    %cst_55 = arith.constant dense<0.000000e+00> : vector<8xf32>
    %112 = vector.multi_reduction <add>, %111, %cst_55 [1] : vector<8x32xf32> to vector<8xf32>
    %113 = vector.shape_cast %112 : vector<8xf32> to vector<8x1xf32>
    %cst_56 = arith.constant 3.200000e+01 : f32
    %114 = vector.broadcast %cst_56 : f32 to vector<8x1xf32>
    %115 = arith.divf %113, %114 : vector<8x1xf32>
    %116 = vector.broadcast %108 : vector<8x1xf32> to vector<8x32xf32>
    %117 = arith.subf %102, %116 : vector<8x32xf32>
    %cst_57 = arith.constant 9.99999974E-6 : f32
    %118 = vector.broadcast %cst_57 : f32 to vector<8x1xf32>
    %119 = arith.addf %115, %118 : vector<8x1xf32>
    %120 = math.rsqrt %119 : vector<8x1xf32>
    %121 = vector.broadcast %120 : vector<8x1xf32> to vector<8x32xf32>
    %122 = arith.mulf %117, %121 : vector<8x32xf32>
    %123 = vector.broadcast %103 : vector<1x32xf32> to vector<8x32xf32>
    %124 = arith.mulf %122, %123 : vector<8x32xf32>
    %125 = vector.broadcast %104 : vector<1x32xf32> to vector<8x32xf32>
    %126 = arith.addf %124, %125 : vector<8x32xf32>
    %c0_58 = arith.constant 0 : index
    %c0_59 = arith.constant 0 : index
    %127 = vector.load %arg13[%c0_58, %c0_59] : memref<64x64xf32, #tpu.memory_space<vmem>>, vector<64x64xf32>
    %128 = vector.extract_strided_slice %0 {offsets = [0, 128], sizes = [32, 64], strides = [1, 1]} : vector<32x516xf32> to vector<32x64xf32>
    %cst_60 = arith.constant dense<0.000000e+00> : vector<8x64xf32>
    %129 = tpu.matmul %126, %128, %cst_60 {dimension_numbers = #tpu.dot_dimension_numbers<[1], [0], [0], [1], [0, 0, 1, 1], [], []>} : vector<8x32xf32>, vector<32x64xf32>, vector<8x64xf32> -> vector<8x64xf32>
    %c0_61 = arith.constant 0 : index
    %c236 = arith.constant 236 : index
    %130 = vector.load %arg14[%c0_61, %c236] : memref<1x944xf32, #tpu.memory_space<vmem>>, vector<1x64xf32>
    %131 = vector.broadcast %130 : vector<1x64xf32> to vector<8x64xf32>
    %132 = arith.addf %129, %131 : vector<8x64xf32>
    %cst_62 = arith.constant 0.000000e+00 : f32
    %133 = vector.broadcast %cst_62 : f32 to vector<8x64xf32>
    %134 = arith.maximumf %132, %133 : vector<8x64xf32>
    %135 = vector.extract_strided_slice %127 {offsets = [0, 0], sizes = [64, 32], strides = [1, 1]} : vector<64x64xf32> to vector<64x32xf32>
    %cst_63 = arith.constant dense<0.000000e+00> : vector<8x32xf32>
    %136 = tpu.matmul %134, %135, %cst_63 {dimension_numbers = #tpu.dot_dimension_numbers<[1], [0], [0], [1], [0, 0, 1, 1], [], []>} : vector<8x64xf32>, vector<64x32xf32>, vector<8x32xf32> -> vector<8x32xf32>
    %c0_64 = arith.constant 0 : index
    %c300 = arith.constant 300 : index
    %137 = vector.load %arg14[%c0_64, %c300] : memref<1x944xf32, #tpu.memory_space<vmem>>, vector<1x32xf32>
    %138 = vector.broadcast %137 : vector<1x32xf32> to vector<8x32xf32>
    %139 = arith.addf %136, %138 : vector<8x32xf32>
    %140 = arith.addf %126, %139 : vector<8x32xf32>
    %c0_65 = arith.constant 0 : index
    %c332 = arith.constant 332 : index
    %141 = vector.load %arg14[%c0_65, %c332] : memref<1x944xf32, #tpu.memory_space<vmem>>, vector<1x32xf32>
    %c0_66 = arith.constant 0 : index
    %c364 = arith.constant 364 : index
    %142 = vector.load %arg14[%c0_66, %c364] : memref<1x944xf32, #tpu.memory_space<vmem>>, vector<1x32xf32>
    %cst_67 = arith.constant dense<0.000000e+00> : vector<8xf32>
    %143 = vector.multi_reduction <add>, %140, %cst_67 [1] : vector<8x32xf32> to vector<8xf32>
    %144 = vector.shape_cast %143 : vector<8xf32> to vector<8x1xf32>
    %cst_68 = arith.constant 3.200000e+01 : f32
    %145 = vector.broadcast %cst_68 : f32 to vector<8x1xf32>
    %146 = arith.divf %144, %145 : vector<8x1xf32>
    %147 = vector.broadcast %146 : vector<8x1xf32> to vector<8x32xf32>
    %148 = arith.subf %140, %147 : vector<8x32xf32>
    %149 = arith.mulf %148, %148 : vector<8x32xf32>
    %cst_69 = arith.constant dense<0.000000e+00> : vector<8xf32>
    %150 = vector.multi_reduction <add>, %149, %cst_69 [1] : vector<8x32xf32> to vector<8xf32>
    %151 = vector.shape_cast %150 : vector<8xf32> to vector<8x1xf32>
    %cst_70 = arith.constant 3.200000e+01 : f32
    %152 = vector.broadcast %cst_70 : f32 to vector<8x1xf32>
    %153 = arith.divf %151, %152 : vector<8x1xf32>
    %154 = vector.broadcast %146 : vector<8x1xf32> to vector<8x32xf32>
    %155 = arith.subf %140, %154 : vector<8x32xf32>
    %cst_71 = arith.constant 9.99999974E-6 : f32
    %156 = vector.broadcast %cst_71 : f32 to vector<8x1xf32>
    %157 = arith.addf %153, %156 : vector<8x1xf32>
    %158 = math.rsqrt %157 : vector<8x1xf32>
    %159 = vector.broadcast %158 : vector<8x1xf32> to vector<8x32xf32>
    %160 = arith.mulf %155, %159 : vector<8x32xf32>
    %161 = vector.broadcast %141 : vector<1x32xf32> to vector<8x32xf32>
    %162 = arith.mulf %160, %161 : vector<8x32xf32>
    %163 = vector.broadcast %142 : vector<1x32xf32> to vector<8x32xf32>
    %164 = arith.addf %162, %163 : vector<8x32xf32>
    %c0_72 = arith.constant 0 : index
    %c0_73 = arith.constant 0 : index
    %c0_74 = arith.constant 0 : index
    %165 = vector.load %arg3[%c0_72, %c0_73, %c0_74] : memref<1x8x4xf32, #tpu.memory_space<vmem>>, vector<1x8x4xf32>
    %166 = vector.shape_cast %165 : vector<1x8x4xf32> to vector<8x4xf32>
    %167 = vector.extract_strided_slice %1 {offsets = [8, 0], sizes = [4, 32], strides = [1, 1]} : vector<20x32xf32> to vector<4x32xf32>
    %cst_75 = arith.constant dense<0.000000e+00> : vector<8x32xf32>
    %168 = tpu.matmul %166, %167, %cst_75 {dimension_numbers = #tpu.dot_dimension_numbers<[1], [0], [0], [1], [0, 0, 1, 1], [], []>} : vector<8x4xf32>, vector<4x32xf32>, vector<8x32xf32> -> vector<8x32xf32>
    %c0_76 = arith.constant 0 : index
    %c0_77 = arith.constant 0 : index
    %c0_78 = arith.constant 0 : index
    %169 = vector.load %arg4[%c0_76, %c0_77, %c0_78] : memref<1x8x4xf32, #tpu.memory_space<vmem>>, vector<1x8x4xf32>
    %170 = vector.shape_cast %169 : vector<1x8x4xf32> to vector<8x4xf32>
    %171 = vector.extract_strided_slice %1 {offsets = [16, 0], sizes = [4, 32], strides = [1, 1]} : vector<20x32xf32> to vector<4x32xf32>
    %cst_79 = arith.constant dense<0.000000e+00> : vector<8x32xf32>
    %172 = tpu.matmul %170, %171, %cst_79 {dimension_numbers = #tpu.dot_dimension_numbers<[1], [0], [0], [1], [0, 0, 1, 1], [], []>} : vector<8x4xf32>, vector<4x32xf32>, vector<8x32xf32> -> vector<8x32xf32>
    %173 = arith.addf %168, %172 : vector<8x32xf32>
    %c0_80 = arith.constant 0 : index
    %c0_81 = arith.constant 0 : index
    %174 = vector.load %arg7[%c0_80, %c0_81] : memref<8x32xf32, #tpu.memory_space<vmem>>, vector<8x32xf32>
    %175 = arith.addf %173, %174 : vector<8x32xf32>
    %176 = tpu.iota {dimensions = array<i32: 0>} : vector<8x8xi32>
    %177 = tpu.iota {dimensions = array<i32: 1>} : vector<8x8xi32>
    %178 = arith.cmpi sle, %177, %176 : vector<8x8xi32>
    %cst_82 = arith.constant 0.000000e+00 : f32
    %cst_83 = arith.constant -1.000000e+30 : f32
    %179 = vector.broadcast %cst_82 : f32 to vector<8x8xf32>
    %180 = vector.broadcast %cst_83 : f32 to vector<8x8xf32>
    %181 = arith.select %178, %179, %180 : vector<8x8xi1>, vector<8x8xf32>
    %182 = vector.extract_strided_slice %0 {offsets = [0, 192], sizes = [32, 96], strides = [1, 1]} : vector<32x516xf32> to vector<32x96xf32>
    %cst_84 = arith.constant dense<0.000000e+00> : vector<8x96xf32>
    %183 = tpu.matmul %175, %182, %cst_84 {dimension_numbers = #tpu.dot_dimension_numbers<[1], [0], [0], [1], [0, 0, 1, 1], [], []>} : vector<8x32xf32>, vector<32x96xf32>, vector<8x96xf32> -> vector<8x96xf32>
    %c0_85 = arith.constant 0 : index
    %c396 = arith.constant 396 : index
    %184 = vector.load %arg14[%c0_85, %c396] : memref<1x944xf32, #tpu.memory_space<vmem>>, vector<1x96xf32>
    %185 = vector.broadcast %184 : vector<1x96xf32> to vector<8x96xf32>
    %186 = arith.addf %183, %185 : vector<8x96xf32>
    %187 = vector.extract_strided_slice %186 {offsets = [0, 0], sizes = [8, 32], strides = [1, 1]} : vector<8x96xf32> to vector<8x32xf32>
    %188 = vector.extract_strided_slice %186 {offsets = [0, 32], sizes = [8, 32], strides = [1, 1]} : vector<8x96xf32> to vector<8x32xf32>
    %189 = vector.extract_strided_slice %186 {offsets = [0, 64], sizes = [8, 32], strides = [1, 1]} : vector<8x96xf32> to vector<8x32xf32>
    %190 = vector.extract_strided_slice %187 {offsets = [0, 0], sizes = [8, 16], strides = [1, 1]} : vector<8x32xf32> to vector<8x16xf32>
    %191 = vector.extract_strided_slice %188 {offsets = [0, 0], sizes = [8, 16], strides = [1, 1]} : vector<8x32xf32> to vector<8x16xf32>
    %192 = vector.extract_strided_slice %189 {offsets = [0, 0], sizes = [8, 16], strides = [1, 1]} : vector<8x32xf32> to vector<8x16xf32>
    %cst_86 = arith.constant dense<0.000000e+00> : vector<8x8xf32>
    %193 = tpu.matmul %190, %191, %cst_86 {dimension_numbers = #tpu.dot_dimension_numbers<[1], [1], [0], [0], [0, 0, 1, 0], [], []>} : vector<8x16xf32>, vector<8x16xf32>, vector<8x8xf32> -> vector<8x8xf32>
    %cst_87 = arith.constant 2.500000e-01 : f32
    %194 = vector.broadcast %cst_87 : f32 to vector<8x8xf32>
    %195 = arith.mulf %193, %194 : vector<8x8xf32>
    %196 = arith.addf %195, %181 : vector<8x8xf32>
    %cst_88 = arith.constant dense<0xFF800000> : vector<8xf32>
    %197 = vector.multi_reduction <maximumf>, %196, %cst_88 [1] : vector<8x8xf32> to vector<8xf32>
    %198 = vector.shape_cast %197 : vector<8xf32> to vector<8x1xf32>
    %199 = vector.broadcast %198 : vector<8x1xf32> to vector<8x8xf32>
    %200 = arith.subf %196, %199 : vector<8x8xf32>
    %201 = math.exp %200 : vector<8x8xf32>
    %cst_89 = arith.constant dense<0.000000e+00> : vector<8xf32>
    %202 = vector.multi_reduction <add>, %201, %cst_89 [1] : vector<8x8xf32> to vector<8xf32>
    %203 = vector.shape_cast %202 : vector<8xf32> to vector<8x1xf32>
    %204 = tpu.reciprocal %203 {approx = true} : vector<8x1xf32> -> vector<8x1xf32>
    %205 = vector.broadcast %204 : vector<8x1xf32> to vector<8x8xf32>
    %206 = arith.mulf %201, %205 : vector<8x8xf32>
    %cst_90 = arith.constant dense<0.000000e+00> : vector<8x16xf32>
    %207 = tpu.matmul %206, %192, %cst_90 {dimension_numbers = #tpu.dot_dimension_numbers<[1], [0], [0], [1], [0, 0, 1, 1], [], []>} : vector<8x8xf32>, vector<8x16xf32>, vector<8x16xf32> -> vector<8x16xf32>
    %208 = vector.extract_strided_slice %187 {offsets = [0, 16], sizes = [8, 16], strides = [1, 1]} : vector<8x32xf32> to vector<8x16xf32>
    %209 = vector.extract_strided_slice %188 {offsets = [0, 16], sizes = [8, 16], strides = [1, 1]} : vector<8x32xf32> to vector<8x16xf32>
    %210 = vector.extract_strided_slice %189 {offsets = [0, 16], sizes = [8, 16], strides = [1, 1]} : vector<8x32xf32> to vector<8x16xf32>
    %cst_91 = arith.constant dense<0.000000e+00> : vector<8x8xf32>
    %211 = tpu.matmul %208, %209, %cst_91 {dimension_numbers = #tpu.dot_dimension_numbers<[1], [1], [0], [0], [0, 0, 1, 0], [], []>} : vector<8x16xf32>, vector<8x16xf32>, vector<8x8xf32> -> vector<8x8xf32>
    %cst_92 = arith.constant 2.500000e-01 : f32
    %212 = vector.broadcast %cst_92 : f32 to vector<8x8xf32>
    %213 = arith.mulf %211, %212 : vector<8x8xf32>
    %214 = arith.addf %213, %181 : vector<8x8xf32>
    %cst_93 = arith.constant dense<0xFF800000> : vector<8xf32>
    %215 = vector.multi_reduction <maximumf>, %214, %cst_93 [1] : vector<8x8xf32> to vector<8xf32>
    %216 = vector.shape_cast %215 : vector<8xf32> to vector<8x1xf32>
    %217 = vector.broadcast %216 : vector<8x1xf32> to vector<8x8xf32>
    %218 = arith.subf %214, %217 : vector<8x8xf32>
    %219 = math.exp %218 : vector<8x8xf32>
    %cst_94 = arith.constant dense<0.000000e+00> : vector<8xf32>
    %220 = vector.multi_reduction <add>, %219, %cst_94 [1] : vector<8x8xf32> to vector<8xf32>
    %221 = vector.shape_cast %220 : vector<8xf32> to vector<8x1xf32>
    %222 = tpu.reciprocal %221 {approx = true} : vector<8x1xf32> -> vector<8x1xf32>
    %223 = vector.broadcast %222 : vector<8x1xf32> to vector<8x8xf32>
    %224 = arith.mulf %219, %223 : vector<8x8xf32>
    %cst_95 = arith.constant dense<0.000000e+00> : vector<8x16xf32>
    %225 = tpu.matmul %224, %210, %cst_95 {dimension_numbers = #tpu.dot_dimension_numbers<[1], [0], [0], [1], [0, 0, 1, 1], [], []>} : vector<8x8xf32>, vector<8x16xf32>, vector<8x16xf32> -> vector<8x16xf32>
    %226 = tpu.concatenate %207, %225 in 1 : vector<8x16xf32>, vector<8x16xf32> -> vector<8x32xf32>
    %227 = vector.extract_strided_slice %0 {offsets = [0, 288], sizes = [32, 32], strides = [1, 1]} : vector<32x516xf32> to vector<32x32xf32>
    %cst_96 = arith.constant dense<0.000000e+00> : vector<8x32xf32>
    %228 = tpu.matmul %226, %227, %cst_96 {dimension_numbers = #tpu.dot_dimension_numbers<[1], [0], [0], [1], [0, 0, 1, 1], [], []>} : vector<8x32xf32>, vector<32x32xf32>, vector<8x32xf32> -> vector<8x32xf32>
    %229 = arith.addf %175, %228 : vector<8x32xf32>
    %c0_97 = arith.constant 0 : index
    %c492 = arith.constant 492 : index
    %230 = vector.load %arg14[%c0_97, %c492] : memref<1x944xf32, #tpu.memory_space<vmem>>, vector<1x32xf32>
    %231 = vector.broadcast %230 : vector<1x32xf32> to vector<8x32xf32>
    %232 = arith.addf %229, %231 : vector<8x32xf32>
    %c0_98 = arith.constant 0 : index
    %c524 = arith.constant 524 : index
    %233 = vector.load %arg14[%c0_98, %c524] : memref<1x944xf32, #tpu.memory_space<vmem>>, vector<1x32xf32>
    %c0_99 = arith.constant 0 : index
    %c556 = arith.constant 556 : index
    %234 = vector.load %arg14[%c0_99, %c556] : memref<1x944xf32, #tpu.memory_space<vmem>>, vector<1x32xf32>
    %cst_100 = arith.constant dense<0.000000e+00> : vector<8xf32>
    %235 = vector.multi_reduction <add>, %232, %cst_100 [1] : vector<8x32xf32> to vector<8xf32>
    %236 = vector.shape_cast %235 : vector<8xf32> to vector<8x1xf32>
    %cst_101 = arith.constant 3.200000e+01 : f32
    %237 = vector.broadcast %cst_101 : f32 to vector<8x1xf32>
    %238 = arith.divf %236, %237 : vector<8x1xf32>
    %239 = vector.broadcast %238 : vector<8x1xf32> to vector<8x32xf32>
    %240 = arith.subf %232, %239 : vector<8x32xf32>
    %241 = arith.mulf %240, %240 : vector<8x32xf32>
    %cst_102 = arith.constant dense<0.000000e+00> : vector<8xf32>
    %242 = vector.multi_reduction <add>, %241, %cst_102 [1] : vector<8x32xf32> to vector<8xf32>
    %243 = vector.shape_cast %242 : vector<8xf32> to vector<8x1xf32>
    %cst_103 = arith.constant 3.200000e+01 : f32
    %244 = vector.broadcast %cst_103 : f32 to vector<8x1xf32>
    %245 = arith.divf %243, %244 : vector<8x1xf32>
    %246 = vector.broadcast %238 : vector<8x1xf32> to vector<8x32xf32>
    %247 = arith.subf %232, %246 : vector<8x32xf32>
    %cst_104 = arith.constant 9.99999974E-6 : f32
    %248 = vector.broadcast %cst_104 : f32 to vector<8x1xf32>
    %249 = arith.addf %245, %248 : vector<8x1xf32>
    %250 = math.rsqrt %249 : vector<8x1xf32>
    %251 = vector.broadcast %250 : vector<8x1xf32> to vector<8x32xf32>
    %252 = arith.mulf %247, %251 : vector<8x32xf32>
    %253 = vector.broadcast %233 : vector<1x32xf32> to vector<8x32xf32>
    %254 = arith.mulf %252, %253 : vector<8x32xf32>
    %255 = vector.broadcast %234 : vector<1x32xf32> to vector<8x32xf32>
    %256 = arith.addf %254, %255 : vector<8x32xf32>
    %257 = vector.extract_strided_slice %0 {offsets = [0, 320], sizes = [32, 32], strides = [1, 1]} : vector<32x516xf32> to vector<32x32xf32>
    %cst_105 = arith.constant dense<0.000000e+00> : vector<8x32xf32>
    %258 = tpu.matmul %256, %257, %cst_105 {dimension_numbers = #tpu.dot_dimension_numbers<[1], [0], [0], [1], [0, 0, 1, 1], [], []>} : vector<8x32xf32>, vector<32x32xf32>, vector<8x32xf32> -> vector<8x32xf32>
    %c0_106 = arith.constant 0 : index
    %c588 = arith.constant 588 : index
    %259 = vector.load %arg14[%c0_106, %c588] : memref<1x944xf32, #tpu.memory_space<vmem>>, vector<1x32xf32>
    %260 = vector.broadcast %259 : vector<1x32xf32> to vector<8x32xf32>
    %261 = arith.addf %258, %260 : vector<8x32xf32>
    %262 = vector.extract_strided_slice %0 {offsets = [0, 352], sizes = [32, 64], strides = [1, 1]} : vector<32x516xf32> to vector<32x64xf32>
    %cst_107 = arith.constant dense<0.000000e+00> : vector<8x64xf32>
    %263 = tpu.matmul %164, %262, %cst_107 {dimension_numbers = #tpu.dot_dimension_numbers<[1], [0], [0], [1], [0, 0, 1, 1], [], []>} : vector<8x32xf32>, vector<32x64xf32>, vector<8x64xf32> -> vector<8x64xf32>
    %c0_108 = arith.constant 0 : index
    %c620 = arith.constant 620 : index
    %264 = vector.load %arg14[%c0_108, %c620] : memref<1x944xf32, #tpu.memory_space<vmem>>, vector<1x64xf32>
    %265 = vector.broadcast %264 : vector<1x64xf32> to vector<8x64xf32>
    %266 = arith.addf %263, %265 : vector<8x64xf32>
    %267 = vector.extract_strided_slice %266 {offsets = [0, 0], sizes = [8, 32], strides = [1, 1]} : vector<8x64xf32> to vector<8x32xf32>
    %268 = vector.extract_strided_slice %266 {offsets = [0, 32], sizes = [8, 32], strides = [1, 1]} : vector<8x64xf32> to vector<8x32xf32>
    %269 = vector.extract_strided_slice %261 {offsets = [0, 0], sizes = [8, 16], strides = [1, 1]} : vector<8x32xf32> to vector<8x16xf32>
    %270 = vector.extract_strided_slice %267 {offsets = [0, 0], sizes = [8, 16], strides = [1, 1]} : vector<8x32xf32> to vector<8x16xf32>
    %271 = vector.extract_strided_slice %268 {offsets = [0, 0], sizes = [8, 16], strides = [1, 1]} : vector<8x32xf32> to vector<8x16xf32>
    %cst_109 = arith.constant dense<0.000000e+00> : vector<8x8xf32>
    %272 = tpu.matmul %269, %270, %cst_109 {dimension_numbers = #tpu.dot_dimension_numbers<[1], [1], [0], [0], [0, 0, 1, 0], [], []>} : vector<8x16xf32>, vector<8x16xf32>, vector<8x8xf32> -> vector<8x8xf32>
    %cst_110 = arith.constant 2.500000e-01 : f32
    %273 = vector.broadcast %cst_110 : f32 to vector<8x8xf32>
    %274 = arith.mulf %272, %273 : vector<8x8xf32>
    %cst_111 = arith.constant dense<0xFF800000> : vector<8xf32>
    %275 = vector.multi_reduction <maximumf>, %274, %cst_111 [1] : vector<8x8xf32> to vector<8xf32>
    %276 = vector.shape_cast %275 : vector<8xf32> to vector<8x1xf32>
    %277 = vector.broadcast %276 : vector<8x1xf32> to vector<8x8xf32>
    %278 = arith.subf %274, %277 : vector<8x8xf32>
    %279 = math.exp %278 : vector<8x8xf32>
    %cst_112 = arith.constant dense<0.000000e+00> : vector<8xf32>
    %280 = vector.multi_reduction <add>, %279, %cst_112 [1] : vector<8x8xf32> to vector<8xf32>
    %281 = vector.shape_cast %280 : vector<8xf32> to vector<8x1xf32>
    %282 = tpu.reciprocal %281 {approx = true} : vector<8x1xf32> -> vector<8x1xf32>
    %283 = vector.broadcast %282 : vector<8x1xf32> to vector<8x8xf32>
    %284 = arith.mulf %279, %283 : vector<8x8xf32>
    %cst_113 = arith.constant dense<0.000000e+00> : vector<8x16xf32>
    %285 = tpu.matmul %284, %271, %cst_113 {dimension_numbers = #tpu.dot_dimension_numbers<[1], [0], [0], [1], [0, 0, 1, 1], [], []>} : vector<8x8xf32>, vector<8x16xf32>, vector<8x16xf32> -> vector<8x16xf32>
    %286 = vector.extract_strided_slice %261 {offsets = [0, 16], sizes = [8, 16], strides = [1, 1]} : vector<8x32xf32> to vector<8x16xf32>
    %287 = vector.extract_strided_slice %267 {offsets = [0, 16], sizes = [8, 16], strides = [1, 1]} : vector<8x32xf32> to vector<8x16xf32>
    %288 = vector.extract_strided_slice %268 {offsets = [0, 16], sizes = [8, 16], strides = [1, 1]} : vector<8x32xf32> to vector<8x16xf32>
    %cst_114 = arith.constant dense<0.000000e+00> : vector<8x8xf32>
    %289 = tpu.matmul %286, %287, %cst_114 {dimension_numbers = #tpu.dot_dimension_numbers<[1], [1], [0], [0], [0, 0, 1, 0], [], []>} : vector<8x16xf32>, vector<8x16xf32>, vector<8x8xf32> -> vector<8x8xf32>
    %cst_115 = arith.constant 2.500000e-01 : f32
    %290 = vector.broadcast %cst_115 : f32 to vector<8x8xf32>
    %291 = arith.mulf %289, %290 : vector<8x8xf32>
    %cst_116 = arith.constant dense<0xFF800000> : vector<8xf32>
    %292 = vector.multi_reduction <maximumf>, %291, %cst_116 [1] : vector<8x8xf32> to vector<8xf32>
    %293 = vector.shape_cast %292 : vector<8xf32> to vector<8x1xf32>
    %294 = vector.broadcast %293 : vector<8x1xf32> to vector<8x8xf32>
    %295 = arith.subf %291, %294 : vector<8x8xf32>
    %296 = math.exp %295 : vector<8x8xf32>
    %cst_117 = arith.constant dense<0.000000e+00> : vector<8xf32>
    %297 = vector.multi_reduction <add>, %296, %cst_117 [1] : vector<8x8xf32> to vector<8xf32>
    %298 = vector.shape_cast %297 : vector<8xf32> to vector<8x1xf32>
    %299 = tpu.reciprocal %298 {approx = true} : vector<8x1xf32> -> vector<8x1xf32>
    %300 = vector.broadcast %299 : vector<8x1xf32> to vector<8x8xf32>
    %301 = arith.mulf %296, %300 : vector<8x8xf32>
    %cst_118 = arith.constant dense<0.000000e+00> : vector<8x16xf32>
    %302 = tpu.matmul %301, %288, %cst_118 {dimension_numbers = #tpu.dot_dimension_numbers<[1], [0], [0], [1], [0, 0, 1, 1], [], []>} : vector<8x8xf32>, vector<8x16xf32>, vector<8x16xf32> -> vector<8x16xf32>
    %303 = tpu.concatenate %285, %302 in 1 : vector<8x16xf32>, vector<8x16xf32> -> vector<8x32xf32>
    %304 = vector.extract_strided_slice %0 {offsets = [0, 416], sizes = [32, 32], strides = [1, 1]} : vector<32x516xf32> to vector<32x32xf32>
    %cst_119 = arith.constant dense<0.000000e+00> : vector<8x32xf32>
    %305 = tpu.matmul %303, %304, %cst_119 {dimension_numbers = #tpu.dot_dimension_numbers<[1], [0], [0], [1], [0, 0, 1, 1], [], []>} : vector<8x32xf32>, vector<32x32xf32>, vector<8x32xf32> -> vector<8x32xf32>
    %306 = arith.addf %256, %305 : vector<8x32xf32>
    %c0_120 = arith.constant 0 : index
    %c684 = arith.constant 684 : index
    %307 = vector.load %arg14[%c0_120, %c684] : memref<1x944xf32, #tpu.memory_space<vmem>>, vector<1x32xf32>
    %308 = vector.broadcast %307 : vector<1x32xf32> to vector<8x32xf32>
    %309 = arith.addf %306, %308 : vector<8x32xf32>
    %c0_121 = arith.constant 0 : index
    %c716 = arith.constant 716 : index
    %310 = vector.load %arg14[%c0_121, %c716] : memref<1x944xf32, #tpu.memory_space<vmem>>, vector<1x32xf32>
    %c0_122 = arith.constant 0 : index
    %c748 = arith.constant 748 : index
    %311 = vector.load %arg14[%c0_122, %c748] : memref<1x944xf32, #tpu.memory_space<vmem>>, vector<1x32xf32>
    %cst_123 = arith.constant dense<0.000000e+00> : vector<8xf32>
    %312 = vector.multi_reduction <add>, %309, %cst_123 [1] : vector<8x32xf32> to vector<8xf32>
    %313 = vector.shape_cast %312 : vector<8xf32> to vector<8x1xf32>
    %cst_124 = arith.constant 3.200000e+01 : f32
    %314 = vector.broadcast %cst_124 : f32 to vector<8x1xf32>
    %315 = arith.divf %313, %314 : vector<8x1xf32>
    %316 = vector.broadcast %315 : vector<8x1xf32> to vector<8x32xf32>
    %317 = arith.subf %309, %316 : vector<8x32xf32>
    %318 = arith.mulf %317, %317 : vector<8x32xf32>
    %cst_125 = arith.constant dense<0.000000e+00> : vector<8xf32>
    %319 = vector.multi_reduction <add>, %318, %cst_125 [1] : vector<8x32xf32> to vector<8xf32>
    %320 = vector.shape_cast %319 : vector<8xf32> to vector<8x1xf32>
    %cst_126 = arith.constant 3.200000e+01 : f32
    %321 = vector.broadcast %cst_126 : f32 to vector<8x1xf32>
    %322 = arith.divf %320, %321 : vector<8x1xf32>
    %323 = vector.broadcast %315 : vector<8x1xf32> to vector<8x32xf32>
    %324 = arith.subf %309, %323 : vector<8x32xf32>
    %cst_127 = arith.constant 9.99999974E-6 : f32
    %325 = vector.broadcast %cst_127 : f32 to vector<8x1xf32>
    %326 = arith.addf %322, %325 : vector<8x1xf32>
    %327 = math.rsqrt %326 : vector<8x1xf32>
    %328 = vector.broadcast %327 : vector<8x1xf32> to vector<8x32xf32>
    %329 = arith.mulf %324, %328 : vector<8x32xf32>
    %330 = vector.broadcast %310 : vector<1x32xf32> to vector<8x32xf32>
    %331 = arith.mulf %329, %330 : vector<8x32xf32>
    %332 = vector.broadcast %311 : vector<1x32xf32> to vector<8x32xf32>
    %333 = arith.addf %331, %332 : vector<8x32xf32>
    %334 = vector.extract_strided_slice %0 {offsets = [0, 448], sizes = [32, 64], strides = [1, 1]} : vector<32x516xf32> to vector<32x64xf32>
    %cst_128 = arith.constant dense<0.000000e+00> : vector<8x64xf32>
    %335 = tpu.matmul %333, %334, %cst_128 {dimension_numbers = #tpu.dot_dimension_numbers<[1], [0], [0], [1], [0, 0, 1, 1], [], []>} : vector<8x32xf32>, vector<32x64xf32>, vector<8x64xf32> -> vector<8x64xf32>
    %c0_129 = arith.constant 0 : index
    %c780 = arith.constant 780 : index
    %336 = vector.load %arg14[%c0_129, %c780] : memref<1x944xf32, #tpu.memory_space<vmem>>, vector<1x64xf32>
    %337 = vector.broadcast %336 : vector<1x64xf32> to vector<8x64xf32>
    %338 = arith.addf %335, %337 : vector<8x64xf32>
    %cst_130 = arith.constant 0.000000e+00 : f32
    %339 = vector.broadcast %cst_130 : f32 to vector<8x64xf32>
    %340 = arith.maximumf %338, %339 : vector<8x64xf32>
    %341 = vector.extract_strided_slice %127 {offsets = [0, 32], sizes = [64, 32], strides = [1, 1]} : vector<64x64xf32> to vector<64x32xf32>
    %cst_131 = arith.constant dense<0.000000e+00> : vector<8x32xf32>
    %342 = tpu.matmul %340, %341, %cst_131 {dimension_numbers = #tpu.dot_dimension_numbers<[1], [0], [0], [1], [0, 0, 1, 1], [], []>} : vector<8x64xf32>, vector<64x32xf32>, vector<8x32xf32> -> vector<8x32xf32>
    %c0_132 = arith.constant 0 : index
    %c844 = arith.constant 844 : index
    %343 = vector.load %arg14[%c0_132, %c844] : memref<1x944xf32, #tpu.memory_space<vmem>>, vector<1x32xf32>
    %344 = vector.broadcast %343 : vector<1x32xf32> to vector<8x32xf32>
    %345 = arith.addf %342, %344 : vector<8x32xf32>
    %346 = arith.addf %333, %345 : vector<8x32xf32>
    %c0_133 = arith.constant 0 : index
    %c876 = arith.constant 876 : index
    %347 = vector.load %arg14[%c0_133, %c876] : memref<1x944xf32, #tpu.memory_space<vmem>>, vector<1x32xf32>
    %c0_134 = arith.constant 0 : index
    %c908 = arith.constant 908 : index
    %348 = vector.load %arg14[%c0_134, %c908] : memref<1x944xf32, #tpu.memory_space<vmem>>, vector<1x32xf32>
    %cst_135 = arith.constant dense<0.000000e+00> : vector<8xf32>
    %349 = vector.multi_reduction <add>, %346, %cst_135 [1] : vector<8x32xf32> to vector<8xf32>
    %350 = vector.shape_cast %349 : vector<8xf32> to vector<8x1xf32>
    %cst_136 = arith.constant 3.200000e+01 : f32
    %351 = vector.broadcast %cst_136 : f32 to vector<8x1xf32>
    %352 = arith.divf %350, %351 : vector<8x1xf32>
    %353 = vector.broadcast %352 : vector<8x1xf32> to vector<8x32xf32>
    %354 = arith.subf %346, %353 : vector<8x32xf32>
    %355 = arith.mulf %354, %354 : vector<8x32xf32>
    %cst_137 = arith.constant dense<0.000000e+00> : vector<8xf32>
    %356 = vector.multi_reduction <add>, %355, %cst_137 [1] : vector<8x32xf32> to vector<8xf32>
    %357 = vector.shape_cast %356 : vector<8xf32> to vector<8x1xf32>
    %cst_138 = arith.constant 3.200000e+01 : f32
    %358 = vector.broadcast %cst_138 : f32 to vector<8x1xf32>
    %359 = arith.divf %357, %358 : vector<8x1xf32>
    %360 = vector.broadcast %352 : vector<8x1xf32> to vector<8x32xf32>
    %361 = arith.subf %346, %360 : vector<8x32xf32>
    %cst_139 = arith.constant 9.99999974E-6 : f32
    %362 = vector.broadcast %cst_139 : f32 to vector<8x1xf32>
    %363 = arith.addf %359, %362 : vector<8x1xf32>
    %364 = math.rsqrt %363 : vector<8x1xf32>
    %365 = vector.broadcast %364 : vector<8x1xf32> to vector<8x32xf32>
    %366 = arith.mulf %361, %365 : vector<8x32xf32>
    %367 = vector.broadcast %347 : vector<1x32xf32> to vector<8x32xf32>
    %368 = arith.mulf %366, %367 : vector<8x32xf32>
    %369 = vector.broadcast %348 : vector<1x32xf32> to vector<8x32xf32>
    %370 = arith.addf %368, %369 : vector<8x32xf32>
    %371 = vector.extract_strided_slice %0 {offsets = [0, 512], sizes = [32, 4], strides = [1, 1]} : vector<32x516xf32> to vector<32x4xf32>
    %cst_140 = arith.constant dense<0.000000e+00> : vector<8x4xf32>
    %372 = tpu.matmul %370, %371, %cst_140 {dimension_numbers = #tpu.dot_dimension_numbers<[1], [0], [0], [1], [0, 0, 1, 1], [], []>} : vector<8x32xf32>, vector<32x4xf32>, vector<8x4xf32> -> vector<8x4xf32>
    %c0_141 = arith.constant 0 : index
    %c940 = arith.constant 940 : index
    %373 = vector.load %arg14[%c0_141, %c940] : memref<1x944xf32, #tpu.memory_space<vmem>>, vector<1x4xf32>
    %374 = vector.broadcast %373 : vector<1x4xf32> to vector<8x4xf32>
    %375 = arith.addf %372, %374 : vector<8x4xf32>
    %c0_142 = arith.constant 0 : index
    %c0_143 = arith.constant 0 : index
    %c0_144 = arith.constant 0 : index
    %376 = vector.load %arg16[%c0_142, %c0_143, %c0_144] : memref<1x8x4xf32, #tpu.memory_space<vmem>>, vector<1x8x4xf32>
    %377 = vector.shape_cast %376 : vector<1x8x4xf32> to vector<8x4xf32>
    %378 = vector.shape_cast %375 : vector<8x4xf32> to vector<1x8x4xf32>
    tpu.vector_store %arg16[%c0_142, %c0_143, %c0_144], %378 {strides = array<i32>} : memref<1x8x4xf32, #tpu.memory_space<vmem>>, vector<1x8x4xf32>,
    return
  }
  func.func @transform_0(%arg0: i32) -> (i32, i32, i32) {
    %c0_i32 = arith.constant 0 : i32
    %c0_i32_0 = arith.constant 0 : i32
    %c0_i32_1 = arith.constant 0 : i32
    return %arg0, %c0_i32, %c0_i32_0 : i32, i32, i32
  }
  func.func @transform_1(%arg0: i32) -> (i32, i32, i32) {
    %c0_i32 = arith.constant 0 : i32
    %c0_i32_0 = arith.constant 0 : i32
    %c0_i32_1 = arith.constant 0 : i32
    return %arg0, %c0_i32, %c0_i32_0 : i32, i32, i32
  }
  func.func @transform_2(%arg0: i32) -> (i32, i32, i32) {
    %c0_i32 = arith.constant 0 : i32
    %c0_i32_0 = arith.constant 0 : i32
    %c0_i32_1 = arith.constant 0 : i32
    return %arg0, %c0_i32, %c0_i32_0 : i32, i32, i32
  }
  func.func @transform_3(%arg0: i32) -> (i32, i32, i32) {
    %c0_i32 = arith.constant 0 : i32
    %c0_i32_0 = arith.constant 0 : i32
    %c0_i32_1 = arith.constant 0 : i32
    return %arg0, %c0_i32, %c0_i32_0 : i32, i32, i32
  }
  func.func @transform_4(%arg0: i32) -> (i32, i32, i32) {
    %c0_i32 = arith.constant 0 : i32
    %c0_i32_0 = arith.constant 0 : i32
    %c0_i32_1 = arith.constant 0 : i32
    return %arg0, %c0_i32, %c0_i32_0 : i32, i32, i32
  }
  func.func @transform_5(%arg0: i32) -> (i32, i32) {
    %c0_i32 = arith.constant 0 : i32
    %c0_i32_0 = arith.constant 0 : i32
    %c0_i32_1 = arith.constant 0 : i32
    return %c0_i32, %c0_i32_0 : i32, i32
  }
  func.func @transform_6(%arg0: i32) -> (i32, i32) {
    %c0_i32 = arith.constant 0 : i32
    %c0_i32_0 = arith.constant 0 : i32
    %c0_i32_1 = arith.constant 0 : i32
    return %c0_i32, %c0_i32_0 : i32, i32
  }
  func.func @transform_7(%arg0: i32) -> (i32, i32) {
    %c0_i32 = arith.constant 0 : i32
    %c0_i32_0 = arith.constant 0 : i32
    %c0_i32_1 = arith.constant 0 : i32
    return %c0_i32, %c0_i32_0 : i32, i32
  }
  func.func @transform_8(%arg0: i32) -> (i32, i32) {
    %c0_i32 = arith.constant 0 : i32
    %c0_i32_0 = arith.constant 0 : i32
    %c0_i32_1 = arith.constant 0 : i32
    return %c0_i32, %c0_i32_0 : i32, i32
  }
  func.func @transform_9(%arg0: i32) -> (i32, i32) {
    %c0_i32 = arith.constant 0 : i32
    %c0_i32_0 = arith.constant 0 : i32
    %c0_i32_1 = arith.constant 0 : i32
    return %c0_i32, %c0_i32_0 : i32, i32
  }
  func.func @transform_10(%arg0: i32) -> (i32, i32) {
    %c0_i32 = arith.constant 0 : i32
    %c0_i32_0 = arith.constant 0 : i32
    %c0_i32_1 = arith.constant 0 : i32
    return %c0_i32, %c0_i32_0 : i32, i32
  }
  func.func @transform_11(%arg0: i32) -> (i32, i32) {
    %c0_i32 = arith.constant 0 : i32
    %c0_i32_0 = arith.constant 0 : i32
    %c0_i32_1 = arith.constant 0 : i32
    return %c0_i32, %c0_i32_0 : i32, i32
  }
  func.func @transform_12(%arg0: i32) -> (i32, i32) {
    %c0_i32 = arith.constant 0 : i32
    %c0_i32_0 = arith.constant 0 : i32
    %c0_i32_1 = arith.constant 0 : i32
    return %c0_i32, %c0_i32_0 : i32, i32
  }
  func.func @transform_13(%arg0: i32) -> (i32, i32) {
    %c0_i32 = arith.constant 0 : i32
    %c0_i32_0 = arith.constant 0 : i32
    %c0_i32_1 = arith.constant 0 : i32
    return %c0_i32, %c0_i32_0 : i32, i32
  }
  func.func @transform_14(%arg0: i32) -> (i32, i32, i32) {
    %c0_i32 = arith.constant 0 : i32
    %c0_i32_0 = arith.constant 0 : i32
    %c0_i32_1 = arith.constant 0 : i32
    return %arg0, %c0_i32, %c0_i32_0 : i32, i32, i32
  }
  func.func @transform_15(%arg0: i32) -> (i32, i32, i32) {
    %c0_i32 = arith.constant 0 : i32
    %c0_i32_0 = arith.constant 0 : i32
    %c0_i32_1 = arith.constant 0 : i32
    return %arg0, %c0_i32, %c0_i32_0 : i32, i32, i32
  }
}

</mosaic_0001>

<llo_original>
// kernel: _lambda_.1
$region0: #{_lambda_.1}
  #allocation0 [shape = 'u32[]', space=smem, size = 0x4, offset = 0x4, fixed_abs, tag = 'smem constant byte address 0x4 - core index']
  #allocation1 [shape = 'u32[72,128]{1,0:T(1,128)}', space=vmem, size = 0x9000, scoped, tag = 'internal scratch']
  %s0 = inlined_call_operand.vmem [shape: f32[2,8,4], index: 0, kind: input, shape index: {}]
  %s1 = inlined_call_operand.vmem [shape: f32[2,8,4], index: 1, kind: input, shape index: {}]
  %s2 = inlined_call_operand.vmem [shape: f32[2,8,4], index: 2, kind: input, shape index: {}]
  %s3 = inlined_call_operand.vmem [shape: f32[2,8,4], index: 3, kind: input, shape index: {}]
  %s4 = inlined_call_operand.vmem [shape: f32[2,8,4], index: 4, kind: input, shape index: {}]
  %s5 = inlined_call_operand.vmem [shape: f32[8,32], index: 5, kind: input, shape index: {}]
  %s6 = inlined_call_operand.vmem [shape: f32[8,32], index: 6, kind: input, shape index: {}]
  %s7 = inlined_call_operand.hbm [shape: f32[4,16], index: 7, kind: input, shape index: {}]
  %s8 = inlined_call_operand.vmem [shape: f32[16,12], index: 8, kind: input, shape index: {}]
  %s9 = inlined_call_operand.hbm [shape: f32[4,16], index: 9, kind: input, shape index: {}]
  %s10 = inlined_call_operand.vmem [shape: f32[20,32], index: 10, kind: input, shape index: {}]
  %s11 = inlined_call_operand.hbm [shape: f32[32,516], index: 11, kind: input, shape index: {}]
  %s12 = inlined_call_operand.vmem [shape: f32[64,64], index: 12, kind: input, shape index: {}]
  %s13 = inlined_call_operand.hbm [shape: f32[1,944], index: 13, kind: input, shape index: {}]
  %s14 = inlined_call_operand.vmem [shape: f32[2,8,16], index: 14, kind: output, shape index: {0}]
  %s15 = inlined_call_operand.vmem [shape: f32[2,8,4], index: 15, kind: output, shape index: {1}]
  %16 = xla_tuple %s14, %s15
  %s17 = sld [smem:[#allocation0]]
  $region113: #{_lambda_.1} parent=0
    _
  %s19 = ssub.s32 1, %s17
  %s20 = scalar_select 0, %s19, %s17
  $region1: #{_lambda_.1} parent=0
    #allocation2 [shape = 'u8[2048]{0}', space=vmem, size = 0x800, scoped, tag = 'input window, operand 7, single buffered']
    #allocation3 [shape = 's32[2]{0}', space=sflag, size = 0x8, scoped, tag = 'scoped memory for _lambda_.1']
    #allocation4 [shape = 'u8[2048]{0}', space=vmem, size = 0x800, scoped, tag = 'input window, operand 9, single buffered']
    #allocation5 [shape = 's32[1]{0}', space=sflag, size = 0x4, scoped, tag = 'scoped memory for _lambda_.1']
    #allocation6 [shape = 'u8[81920]{0}', space=vmem, size = 0x14000, scoped, tag = 'input window, operand 11, single buffered']
    #allocation7 [shape = 'u8[4096]{0}', space=vmem, size = 0x1000, scoped, tag = 'input window, operand 13, single buffered']
    #allocation8 [shape = 's32[1]{0}', space=sflag, size = 0x4, scoped, tag = 'scoped memory for _lambda_.1']
    %21 = vsyncpa [#allocation3], 0
    %22 = vsyncpa [#allocation5], 0
    %23 = vsyncpa [#allocation8], 0
    loop: start=0, step=1, limit=4
    $region2: #{_lambda_.1} parent=1 // loop_pre_header
      _
    $region3: #{_lambda_.1} parent=1 // loop_header
      %s25 = sphi 0, %s29
      %p26 = scmp.ge.s32.totalorder %s25, 4
      %s35 = sphi 0, %s37
      %s38 = sphi 0, %s35
      %s39 = sphi 0, %s38
      %s55 = sphi 0, %s39
      %s61 = sphi 0, %s63
      %s64 = sphi 0, %s61
      %s65 = sphi 0, %s64
      %s81 = sphi 0, %s65
      %s87 = sphi 0, %s89
      %s90 = sphi 0, %s87
      %s91 = sphi 0, %s90
      %s107 = sphi 0, %s91
      %s113 = sphi 0, %s115
      %s116 = sphi 0, %s113
      %s117 = sphi 0, %s116
      %s133 = sphi 0, %s117
      %s139 = sphi 0, %s141
      %s142 = sphi 0, %s139
      %s143 = sphi 0, %s142
      %s159 = sphi 0, %s143
      %s163 = sphi 0, %s163
      %s165 = sphi 0, %s163
      %s166 = sphi 0, %s165
      %s180 = sphi 0, %s166
      %s184 = sphi 0, %s184
      %s186 = sphi 0, %s184
      %s187 = sphi 0, %s186
      %s201 = sphi 0, %s187
      %s205 = sphi 0, %s205
      %s207 = sphi 0, %s205
      %s208 = sphi 0, %s207
      %s222 = sphi 0, %s208
      %s226 = sphi 0, %s226
      %s228 = sphi 0, %s226
      %s229 = sphi 0, %s228
      %s243 = sphi 0, %s229
      %s247 = sphi 0, %s247
      %s249 = sphi 0, %s247
      %s250 = sphi 0, %s249
      %s264 = sphi 0, %s250
      %s268 = sphi 0, %s268
      %s270 = sphi 0, %s268
      %s271 = sphi 0, %s270
      %s285 = sphi 0, %s271
      %s289 = sphi 0, %s289
      %s291 = sphi 0, %s289
      %s292 = sphi 0, %s291
      %s306 = sphi 0, %s292
      %s310 = sphi 0, %s310
      %s312 = sphi 0, %s310
      %s313 = sphi 0, %s312
      %s327 = sphi 0, %s313
      %s331 = sphi 0, %s331
      %s333 = sphi 0, %s331
      %s334 = sphi 0, %s333
      %s348 = sphi 0, %s334
      %s354 = sphi 0, %s356
      %s357 = sphi 0, %s354
      %s358 = sphi 0, %s357
      %s374 = sphi 0, %s358
      %s380 = sphi 0, %s382
      %s383 = sphi 0, %s380
      %s384 = sphi 0, %s383
      %s400 = sphi 0, %s384
    $region4: #{_lambda_.1} parent=1 // loop_header_branch
      %28 = sbr.rel (%p26) target = $region8
    $region5: #{_lambda_.1} parent=1 // loop_body
      %s30 = ssub.s32 %s25, 1
      %s31 = ssub.s32 %s25, 2
      %s32 = sadd.s32 %s25, 1
      %s33 = ssub.s32 %s25, %s32
      %p34 = scmp.eq.s32.totalorder %s33, 0
      %s36 = sadd.s32 %s35, 1
      %s37 = scalar_select %p34, %s35, %s36
      %p40 = pneg %p34
      %p41 = scmp.eq.s32.totalorder %s25, 1
      %p42 = por %p40, %p41
      %p43 = scmp.ne.s32.totalorder %s35, %s38
      %p44 = scmp.eq.s32.totalorder %s25, 0
      %p45 = por %p43, %p44
      %p46 = scmp.ne.s32.totalorder %s35, %s38
      %p47 = scmp.eq.s32.totalorder %s30, 1
      %p48 = por %p46, %p47
      %p49 = scmp.ne.s32.totalorder %s38, %s39
      %p50 = scmp.eq.s32.totalorder %s30, 0
      %p51 = por %p49, %p50
      %p52 = scmp.ne.s32.totalorder %s38, %s39
      %p53 = scmp.eq.s32.totalorder %s31, 1
      %p54 = por %p52, %p53
      %p56 = scmp.ne.s32.totalorder %s39, %s55
      %p57 = scmp.eq.s32.totalorder %s31, 0
      %p58 = por %p56, %p57
      %s59 = ssub.s32 %s25, %s32
      %p60 = scmp.eq.s32.totalorder %s59, 0
      %s62 = sadd.s32 %s61, 1
      %s63 = scalar_select %p60, %s61, %s62
      %p66 = pneg %p60
      %p67 = scmp.eq.s32.totalorder %s25, 1
      %p68 = por %p66, %p67
      %p69 = scmp.ne.s32.totalorder %s61, %s64
      %p70 = scmp.eq.s32.totalorder %s25, 0
      %p71 = por %p69, %p70
      %p72 = scmp.ne.s32.totalorder %s61, %s64
      %p73 = scmp.eq.s32.totalorder %s30, 1
      %p74 = por %p72, %p73
      %p75 = scmp.ne.s32.totalorder %s64, %s65
      %p76 = scmp.eq.s32.totalorder %s30, 0
      %p77 = por %p75, %p76
      %p78 = scmp.ne.s32.totalorder %s64, %s65
      %p79 = scmp.eq.s32.totalorder %s31, 1
      %p80 = por %p78, %p79
      %p82 = scmp.ne.s32.totalorder %s65, %s81
      %p83 = scmp.eq.s32.totalorder %s31, 0
      %p84 = por %p82, %p83
      %s85 = ssub.s32 %s25, %s32
      %p86 = scmp.eq.s32.totalorder %s85, 0
      %s88 = sadd.s32 %s87, 1
      %s89 = scalar_select %p86, %s87, %s88
      %p92 = pneg %p86
      %p93 = scmp.eq.s32.totalorder %s25, 1
      %p94 = por %p92, %p93
      %p95 = scmp.ne.s32.totalorder %s87, %s90
      %p96 = scmp.eq.s32.totalorder %s25, 0
      %p97 = por %p95, %p96
      %p98 = scmp.ne.s32.totalorder %s87, %s90
      %p99 = scmp.eq.s32.totalorder %s30, 1
      %p100 = por %p98, %p99
      %p101 = scmp.ne.s32.totalorder %s90, %s91
      %p102 = scmp.eq.s32.totalorder %s30, 0
      %p103 = por %p101, %p102
      %p104 = scmp.ne.s32.totalorder %s90, %s91
      %p105 = scmp.eq.s32.totalorder %s31, 1
      %p106 = por %p104, %p105
      %p108 = scmp.ne.s32.totalorder %s91, %s107
      %p109 = scmp.eq.s32.totalorder %s31, 0
      %p110 = por %p108, %p109
      %s111 = ssub.s32 %s25, %s32
      %p112 = scmp.eq.s32.totalorder %s111, 0
      %s114 = sadd.s32 %s113, 1
      %s115 = scalar_select %p112, %s113, %s114
      %p118 = pneg %p112
      %p119 = scmp.eq.s32.totalorder %s25, 1
      %p120 = por %p118, %p119
      %p121 = scmp.ne.s32.totalorder %s113, %s116
      %p122 = scmp.eq.s32.totalorder %s25, 0
      %p123 = por %p121, %p122
      %p124 = scmp.ne.s32.totalorder %s113, %s116
      %p125 = scmp.eq.s32.totalorder %s30, 1
      %p126 = por %p124, %p125
      %p127 = scmp.ne.s32.totalorder %s116, %s117
      %p128 = scmp.eq.s32.totalorder %s30, 0
      %p129 = por %p127, %p128
      %p130 = scmp.ne.s32.totalorder %s116, %s117
      %p131 = scmp.eq.s32.totalorder %s31, 1
      %p132 = por %p130, %p131
      %p134 = scmp.ne.s32.totalorder %s117, %s133
      %p135 = scmp.eq.s32.totalorder %s31, 0
      %p136 = por %p134, %p135
      %s137 = ssub.s32 %s25, %s32
      %p138 = scmp.eq.s32.totalorder %s137, 0
      %s140 = sadd.s32 %s139, 1
      %s141 = scalar_select %p138, %s139, %s140
      %p144 = pneg %p138
      %p145 = scmp.eq.s32.totalorder %s25, 1
      %p146 = por %p144, %p145
      %p147 = scmp.ne.s32.totalorder %s139, %s142
      %p148 = scmp.eq.s32.totalorder %s25, 0
      %p149 = por %p147, %p148
      %p150 = scmp.ne.s32.totalorder %s139, %s142
      %p151 = scmp.eq.s32.totalorder %s30, 1
      %p152 = por %p150, %p151
      %p153 = scmp.ne.s32.totalorder %s142, %s143
      %p154 = scmp.eq.s32.totalorder %s30, 0
      %p155 = por %p153, %p154
      %p156 = scmp.ne.s32.totalorder %s142, %s143
      %p157 = scmp.eq.s32.totalorder %s31, 1
      %p158 = por %p156, %p157
      %p160 = scmp.ne.s32.totalorder %s143, %s159
      %p161 = scmp.eq.s32.totalorder %s31, 0
      %p162 = por %p160, %p161
      %s164 = sadd.s32 %s163, 1
      %p167 = scmp.eq.s32.totalorder %s25, 1
      %p168 = scmp.ne.s32.totalorder %s163, %s165
      %p169 = scmp.eq.s32.totalorder %s25, 0
      %p170 = por %p168, %p169
      %p171 = scmp.ne.s32.totalorder %s163, %s165
      %p172 = scmp.eq.s32.totalorder %s30, 1
      %p173 = por %p171, %p172
      %p174 = scmp.ne.s32.totalorder %s165, %s166
      %p175 = scmp.eq.s32.totalorder %s30, 0
      %p176 = por %p174, %p175
      %p177 = scmp.ne.s32.totalorder %s165, %s166
      %p178 = scmp.eq.s32.totalorder %s31, 1
      %p179 = por %p177, %p178
      %p181 = scmp.ne.s32.totalorder %s166, %s180
      %p182 = scmp.eq.s32.totalorder %s31, 0
      %p183 = por %p181, %p182
      %s185 = sadd.s32 %s184, 1
      %p188 = scmp.eq.s32.totalorder %s25, 1
      %p189 = scmp.ne.s32.totalorder %s184, %s186
      %p190 = scmp.eq.s32.totalorder %s25, 0
      %p191 = por %p189, %p190
      %p192 = scmp.ne.s32.totalorder %s184, %s186
      %p193 = scmp.eq.s32.totalorder %s30, 1
      %p194 = por %p192, %p193
      %p195 = scmp.ne.s32.totalorder %s186, %s187
      %p196 = scmp.eq.s32.totalorder %s30, 0
      %p197 = por %p195, %p196
      %p198 = scmp.ne.s32.totalorder %s186, %s187
      %p199 = scmp.eq.s32.totalorder %s31, 1
      %p200 = por %p198, %p199
      %p202 = scmp.ne.s32.totalorder %s187, %s201
      %p203 = scmp.eq.s32.totalorder %s31, 0
      %p204 = por %p202, %p203
      %s206 = sadd.s32 %s205, 1
      %p209 = scmp.eq.s32.totalorder %s25, 1
      %p210 = scmp.ne.s32.totalorder %s205, %s207
      %p211 = scmp.eq.s32.totalorder %s25, 0
      %p212 = por %p210, %p211
      %p213 = scmp.ne.s32.totalorder %s205, %s207
      %p214 = scmp.eq.s32.totalorder %s30, 1
      %p215 = por %p213, %p214
      %p216 = scmp.ne.s32.totalorder %s207, %s208
      %p217 = scmp.eq.s32.totalorder %s30, 0
      %p218 = por %p216, %p217
      %p219 = scmp.ne.s32.totalorder %s207, %s208
      %p220 = scmp.eq.s32.totalorder %s31, 1
      %p221 = por %p219, %p220
      %p223 = scmp.ne.s32.totalorder %s208, %s222
      %p224 = scmp.eq.s32.totalorder %s31, 0
      %p225 = por %p223, %p224
      %s227 = sadd.s32 %s226, 1
      %p230 = scmp.eq.s32.totalorder %s25, 1
      %p231 = scmp.ne.s32.totalorder %s226, %s228
      %p232 = scmp.eq.s32.totalorder %s25, 0
      %p233 = por %p231, %p232
      %p234 = scmp.ne.s32.totalorder %s226, %s228
      %p235 = scmp.eq.s32.totalorder %s30, 1
      %p236 = por %p234, %p235
      %p237 = scmp.ne.s32.totalorder %s228, %s229
      %p238 = scmp.eq.s32.totalorder %s30, 0
      %p239 = por %p237, %p238
      %p240 = scmp.ne.s32.totalorder %s228, %s229
      %p241 = scmp.eq.s32.totalorder %s31, 1
      %p242 = por %p240, %p241
      %p244 = scmp.ne.s32.totalorder %s229, %s243
      %p245 = scmp.eq.s32.totalorder %s31, 0
      %p246 = por %p244, %p245
      %s248 = sadd.s32 %s247, 1
      %p251 = scmp.eq.s32.totalorder %s25, 1
      %p252 = scmp.ne.s32.totalorder %s247, %s249
      %p253 = scmp.eq.s32.totalorder %s25, 0
      %p254 = por %p252, %p253
      %p255 = scmp.ne.s32.totalorder %s247, %s249
      %p256 = scmp.eq.s32.totalorder %s30, 1
      %p257 = por %p255, %p256
      %p258 = scmp.ne.s32.totalorder %s249, %s250
      %p259 = scmp.eq.s32.totalorder %s30, 0
      %p260 = por %p258, %p259
      %p261 = scmp.ne.s32.totalorder %s249, %s250
      %p262 = scmp.eq.s32.totalorder %s31, 1
      %p263 = por %p261, %p262
      %p265 = scmp.ne.s32.totalorder %s250, %s264
      %p266 = scmp.eq.s32.totalorder %s31, 0
      %p267 = por %p265, %p266
      %s269 = sadd.s32 %s268, 1
      %p272 = scmp.eq.s32.totalorder %s25, 1
      %p273 = scmp.ne.s32.totalorder %s268, %s270
      %p274 = scmp.eq.s32.totalorder %s25, 0
      %p275 = por %p273, %p274
      %p276 = scmp.ne.s32.totalorder %s268, %s270
      %p277 = scmp.eq.s32.totalorder %s30, 1
      %p278 = por %p276, %p277
      %p279 = scmp.ne.s32.totalorder %s270, %s271
      %p280 = scmp.eq.s32.totalorder %s30, 0
      %p281 = por %p279, %p280
      %p282 = scmp.ne.s32.totalorder %s270, %s271
      %p283 = scmp.eq.s32.totalorder %s31, 1
      %p284 = por %p282, %p283
      %p286 = scmp.ne.s32.totalorder %s271, %s285
      %p287 = scmp.eq.s32.totalorder %s31, 0
      %p288 = por %p286, %p287
      %s290 = sadd.s32 %s289, 1
      %p293 = scmp.eq.s32.totalorder %s25, 1
      %p294 = scmp.ne.s32.totalorder %s289, %s291
      %p295 = scmp.eq.s32.totalorder %s25, 0
      %p296 = por %p294, %p295
      %p297 = scmp.ne.s32.totalorder %s289, %s291
      %p298 = scmp.eq.s32.totalorder %s30, 1
      %p299 = por %p297, %p298
      %p300 = scmp.ne.s32.totalorder %s291, %s292
      %p301 = scmp.eq.s32.totalorder %s30, 0
      %p302 = por %p300, %p301
      %p303 = scmp.ne.s32.totalorder %s291, %s292
      %p304 = scmp.eq.s32.totalorder %s31, 1
      %p305 = por %p303, %p304
      %p307 = scmp.ne.s32.totalorder %s292, %s306
      %p308 = scmp.eq.s32.totalorder %s31, 0
      %p309 = por %p307, %p308
      %s311 = sadd.s32 %s310, 1
      %p314 = scmp.eq.s32.totalorder %s25, 1
      %p315 = scmp.ne.s32.totalorder %s310, %s312
      %p316 = scmp.eq.s32.totalorder %s25, 0
      %p317 = por %p315, %p316
      %p318 = scmp.ne.s32.totalorder %s310, %s312
      %p319 = scmp.eq.s32.totalorder %s30, 1
      %p320 = por %p318, %p319
      %p321 = scmp.ne.s32.totalorder %s312, %s313
      %p322 = scmp.eq.s32.totalorder %s30, 0
      %p323 = por %p321, %p322
      %p324 = scmp.ne.s32.totalorder %s312, %s313
      %p325 = scmp.eq.s32.totalorder %s31, 1
      %p326 = por %p324, %p325
      %p328 = scmp.ne.s32.totalorder %s313, %s327
      %p329 = scmp.eq.s32.totalorder %s31, 0
      %p330 = por %p328, %p329
      %s332 = sadd.s32 %s331, 1
      %p335 = scmp.eq.s32.totalorder %s25, 1
      %p336 = scmp.ne.s32.totalorder %s331, %s333
      %p337 = scmp.eq.s32.totalorder %s25, 0
      %p338 = por %p336, %p337
      %p339 = scmp.ne.s32.totalorder %s331, %s333
      %p340 = scmp.eq.s32.totalorder %s30, 1
      %p341 = por %p339, %p340
      %p342 = scmp.ne.s32.totalorder %s333, %s334
      %p343 = scmp.eq.s32.totalorder %s30, 0
      %p344 = por %p342, %p343
      %p345 = scmp.ne.s32.totalorder %s333, %s334
      %p346 = scmp.eq.s32.totalorder %s31, 1
      %p347 = por %p345, %p346
      %p349 = scmp.ne.s32.totalorder %s334, %s348
      %p350 = scmp.eq.s32.totalorder %s31, 0
      %p351 = por %p349, %p350
      %s352 = ssub.s32 %s25, %s32
      %p353 = scmp.eq.s32.totalorder %s352, 0
      %s355 = sadd.s32 %s354, 1
      %s356 = scalar_select %p353, %s354, %s355
      %p359 = pneg %p353
      %p360 = scmp.eq.s32.totalorder %s25, 1
      %p361 = por %p359, %p360
      %p362 = scmp.ne.s32.totalorder %s354, %s357
      %p363 = scmp.eq.s32.totalorder %s25, 0
      %p364 = por %p362, %p363
      %p365 = scmp.ne.s32.totalorder %s354, %s357
      %p366 = scmp.eq.s32.totalorder %s30, 1
      %p367 = por %p365, %p366
      %p368 = scmp.ne.s32.totalorder %s357, %s358
      %p369 = scmp.eq.s32.totalorder %s30, 0
      %p370 = por %p368, %p369
      %p371 = scmp.ne.s32.totalorder %s357, %s358
      %p372 = scmp.eq.s32.totalorder %s31, 1
      %p373 = por %p371, %p372
      %p375 = scmp.ne.s32.totalorder %s358, %s374
      %p376 = scmp.eq.s32.totalorder %s31, 0
      %p377 = por %p375, %p376
      %s378 = ssub.s32 %s25, %s32
      %p379 = scmp.eq.s32.totalorder %s378, 0
      %s381 = sadd.s32 %s380, 1
      %s382 = scalar_select %p379, %s380, %s381
      %p385 = pneg %p379
      %p386 = scmp.eq.s32.totalorder %s25, 1
      %p387 = por %p385, %p386
      %p388 = scmp.ne.s32.totalorder %s380, %s383
      %p389 = scmp.eq.s32.totalorder %s25, 0
      %p390 = por %p388, %p389
      %p391 = scmp.ne.s32.totalorder %s380, %s383
      %p392 = scmp.eq.s32.totalorder %s30, 1
      %p393 = por %p391, %p392
      %p394 = scmp.ne.s32.totalorder %s383, %s384
      %p395 = scmp.eq.s32.totalorder %s30, 0
      %p396 = por %p394, %p395
      %p397 = scmp.ne.s32.totalorder %s383, %s384
      %p398 = scmp.eq.s32.totalorder %s31, 1
      %p399 = por %p397, %p398
      %p401 = scmp.ne.s32.totalorder %s384, %s400
      %p402 = scmp.eq.s32.totalorder %s31, 0
      %p403 = por %p401, %p402
      %p404 = scmp.le.s32.totalorder 1, %s25
      %p405 = scmp.lt.s32.totalorder %s25, 3
      %p406 = pnand %p404, %p405
      %p407 = pneg %p406
      // Predicated region
      $region9: #{_lambda_.1} parent=5 // pred_check
        _
      $region10: #{_lambda_.1} parent=5 // pred_check_branch
        %409 = sbr.rel (%p406) target = $region12
      $region11: #{_lambda_.1} parent=5 // pred_region
        %s410 = ssub.s32 %s25, 1
        // Predicated region
        $region13: #{_lambda_.1} parent=11 // pred_check
          %p411 = pneg %p176
        $region14: #{_lambda_.1} parent=11 // pred_check_branch
          %413 = sbr.rel (%p411) target = $region16
        $region15: #{_lambda_.1} parent=11 // pred_region
          _
        $region16: #{_lambda_.1} parent=11 // pred_fallthru
          _
        // Predicated region
        $region17: #{_lambda_.1} parent=11 // pred_check
          %p414 = pneg %p197
        $region18: #{_lambda_.1} parent=11 // pred_check_branch
          %416 = sbr.rel (%p414) target = $region20
        $region19: #{_lambda_.1} parent=11 // pred_region
          _
        $region20: #{_lambda_.1} parent=11 // pred_fallthru
          _
        // Predicated region
        $region21: #{_lambda_.1} parent=11 // pred_check
          %p417 = pneg %p218
        $region22: #{_lambda_.1} parent=11 // pred_check_branch
          %419 = sbr.rel (%p417) target = $region24
        $region23: #{_lambda_.1} parent=11 // pred_region
          %421 = vsyncadd [#allocation3], 0
          %s423 = sshll.u32 %s7, 4
          %s424 = int_to_ptr.hbm [resolvable:$true] %s423
          %s425 = sshll.u32 [#allocation2], 4
          %s426 = int_to_ptr.vmem [resolvable:$true] %s425
          %428 = dma.hbm_to_vmem [thread:$0]  %s424, 64, %s426, [#allocation3]
        $region24: #{_lambda_.1} parent=11 // pred_fallthru
          _
        // Predicated region
        $region25: #{_lambda_.1} parent=11 // pred_check
          %p429 = pneg %p239
        $region26: #{_lambda_.1} parent=11 // pred_check_branch
          %431 = sbr.rel (%p429) target = $region28
        $region27: #{_lambda_.1} parent=11 // pred_region
          _
        $region28: #{_lambda_.1} parent=11 // pred_fallthru
          _
        // Predicated region
        $region29: #{_lambda_.1} parent=11 // pred_check
          %p432 = pneg %p260
        $region30: #{_lambda_.1} parent=11 // pred_check_branch
          %434 = sbr.rel (%p432) target = $region32
        $region31: #{_lambda_.1} parent=11 // pred_region
          %436 = vsyncadd [#allocation5], 0
          %s438 = sshll.u32 %s9, 4
          %s439 = int_to_ptr.hbm [resolvable:$true] %s438
          %s440 = sshll.u32 [#allocation4], 4
          %s441 = int_to_ptr.vmem [resolvable:$true] %s440
          %443 = dma.hbm_to_vmem [thread:$0]  %s439, 64, %s441, [#allocation5]
        $region32: #{_lambda_.1} parent=11 // pred_fallthru
          _
        // Predicated region
        $region33: #{_lambda_.1} parent=11 // pred_check
          %p444 = pneg %p281
        $region34: #{_lambda_.1} parent=11 // pred_check_branch
          %446 = sbr.rel (%p444) target = $region36
        $region35: #{_lambda_.1} parent=11 // pred_region
          _
        $region36: #{_lambda_.1} parent=11 // pred_fallthru
          _
        // Predicated region
        $region37: #{_lambda_.1} parent=11 // pred_check
          %p447 = pneg %p302
        $region38: #{_lambda_.1} parent=11 // pred_check_branch
          %449 = sbr.rel (%p447) target = $region40
        $region39: #{_lambda_.1} parent=11 // pred_region
          %451 = vsyncadd [#allocation5], 0
          %s452 = sshll.u32 %s11, 4
          %s453 = int_to_ptr.hbm [resolvable:$true] %s452
          %s454 = sshll.u32 [#allocation6], 4
          %s455 = int_to_ptr.vmem [resolvable:$true] %s454
          %460 = dma.hbm_to_vmem [thread:$0]  %s453, 2560, %s455, [#allocation5], 640, 640, 40
        $region40: #{_lambda_.1} parent=11 // pred_fallthru
          _
        // Predicated region
        $region41: #{_lambda_.1} parent=11 // pred_check
          %p461 = pneg %p323
        $region42: #{_lambda_.1} parent=11 // pred_check_branch
          %463 = sbr.rel (%p461) target = $region44
        $region43: #{_lambda_.1} parent=11 // pred_region
          _
        $region44: #{_lambda_.1} parent=11 // pred_fallthru
          _
        // Predicated region
        $region45: #{_lambda_.1} parent=11 // pred_check
          %p464 = pneg %p344
        $region46: #{_lambda_.1} parent=11 // pred_check_branch
          %466 = sbr.rel (%p464) target = $region48
        $region47: #{_lambda_.1} parent=11 // pred_region
          %468 = vsyncadd [#allocation8], 0
          %s470 = sshll.u32 %s13, 4
          %s471 = int_to_ptr.hbm [resolvable:$true] %s470
          %s472 = sshll.u32 [#allocation7], 4
          %s473 = int_to_ptr.vmem [resolvable:$true] %s472
          %475 = dma.hbm_to_vmem [thread:$0]  %s471, 128, %s473, [#allocation8]
        $region48: #{_lambda_.1} parent=11 // pred_fallthru
          _
      $region12: #{_lambda_.1} parent=5 // pred_fallthru
        _
      %p476 = scmp.lt.s32.totalorder %s25, 2
      // Predicated region
      $region49: #{_lambda_.1} parent=5 // pred_check
        %p477 = pneg %p476
      $region50: #{_lambda_.1} parent=5 // pred_check_branch
        %479 = sbr.rel (%p477) target = $region52
      $region51: #{_lambda_.1} parent=5 // pred_region
        // Predicated region
        $region53: #{_lambda_.1} parent=51 // pred_check
          %p480 = pneg %p45
        $region54: #{_lambda_.1} parent=51 // pred_check_branch
          %482 = sbr.rel (%p480) target = $region56
        $region55: #{_lambda_.1} parent=51 // pred_region
          %p483 = scmp.lt.s32.totalorder %s25, 1
          %s484 = scalar_select %p483, %s25, 1
          %s485 = smul.addr %s484, 8
          %s486 = scalar_lea.vmem %s0, %s485
        $region56: #{_lambda_.1} parent=51 // pred_fallthru
          _
        // Predicated region
        $region57: #{_lambda_.1} parent=51 // pred_check
          %p487 = pneg %p71
        $region58: #{_lambda_.1} parent=51 // pred_check_branch
          %489 = sbr.rel (%p487) target = $region60
        $region59: #{_lambda_.1} parent=51 // pred_region
          %p490 = scmp.lt.s32.totalorder %s25, 1
          %s491 = scalar_select %p490, %s25, 1
          %s492 = smul.addr %s491, 8
          %s493 = scalar_lea.vmem %s1, %s492
        $region60: #{_lambda_.1} parent=51 // pred_fallthru
          _
        // Predicated region
        $region61: #{_lambda_.1} parent=51 // pred_check
          %p494 = pneg %p97
        $region62: #{_lambda_.1} parent=51 // pred_check_branch
          %496 = sbr.rel (%p494) target = $region64
        $region63: #{_lambda_.1} parent=51 // pred_region
          %p497 = scmp.lt.s32.totalorder %s25, 1
          %s498 = scalar_select %p497, %s25, 1
          %s499 = smul.addr %s498, 8
          %s500 = scalar_lea.vmem %s2, %s499
        $region64: #{_lambda_.1} parent=51 // pred_fallthru
          _
        // Predicated region
        $region65: #{_lambda_.1} parent=51 // pred_check
          %p501 = pneg %p123
        $region66: #{_lambda_.1} parent=51 // pred_check_branch
          %503 = sbr.rel (%p501) target = $region68
        $region67: #{_lambda_.1} parent=51 // pred_region
          %p504 = scmp.lt.s32.totalorder %s25, 1
          %s505 = scalar_select %p504, %s25, 1
          %s506 = smul.addr %s505, 8
          %s507 = scalar_lea.vmem %s3, %s506
        $region68: #{_lambda_.1} parent=51 // pred_fallthru
          _
        // Predicated region
        $region69: #{_lambda_.1} parent=51 // pred_check
          %p508 = pneg %p149
        $region70: #{_lambda_.1} parent=51 // pred_check_branch
          %510 = sbr.rel (%p508) target = $region72
        $region71: #{_lambda_.1} parent=51 // pred_region
          %p511 = scmp.lt.s32.totalorder %s25, 1
          %s512 = scalar_select %p511, %s25, 1
          %s513 = smul.addr %s512, 8
          %s514 = scalar_lea.vmem %s4, %s513
        $region72: #{_lambda_.1} parent=51 // pred_fallthru
          _
      $region52: #{_lambda_.1} parent=5 // pred_fallthru
        _
      %p515 = scmp.le.s32.totalorder 1, %s25
      %p516 = scmp.lt.s32.totalorder %s25, 3
      %p517 = pnand %p515, %p516
      %p518 = pneg %p517
      // Predicated region
      $region73: #{_lambda_.1} parent=5 // pred_check
        _
      $region74: #{_lambda_.1} parent=5 // pred_check_branch
        %520 = sbr.rel (%p517) target = $region76
      $region75: #{_lambda_.1} parent=5 // pred_region
        %s521 = ssub.s32 %s25, 1
        // Predicated region
        $region77: #{_lambda_.1} parent=75 // pred_check
          %p522 = pneg %p218
        $region78: #{_lambda_.1} parent=75 // pred_check_branch
          %524 = sbr.rel (%p522) target = $region80
        $region79: #{_lambda_.1} parent=75 // pred_region
          %526 = dma.done [#allocation3], 64
        $region80: #{_lambda_.1} parent=75 // pred_fallthru
          _
        // Predicated region
        $region81: #{_lambda_.1} parent=75 // pred_check
          %p527 = pneg %p260
        $region82: #{_lambda_.1} parent=75 // pred_check_branch
          %529 = sbr.rel (%p527) target = $region84
        $region83: #{_lambda_.1} parent=75 // pred_region
          %531 = dma.done [#allocation5], 64
        $region84: #{_lambda_.1} parent=75 // pred_fallthru
          _
        // Predicated region
        $region85: #{_lambda_.1} parent=75 // pred_check
          %p532 = pneg %p302
        $region86: #{_lambda_.1} parent=75 // pred_check_branch
          %534 = sbr.rel (%p532) target = $region88
        $region87: #{_lambda_.1} parent=75 // pred_region
          %536 = dma.done [#allocation5], 2560
        $region88: #{_lambda_.1} parent=75 // pred_fallthru
          _
        // Predicated region
        $region89: #{_lambda_.1} parent=75 // pred_check
          %p537 = pneg %p344
        $region90: #{_lambda_.1} parent=75 // pred_check_branch
          %539 = sbr.rel (%p537) target = $region92
        $region91: #{_lambda_.1} parent=75 // pred_region
          %541 = dma.done [#allocation8], 128
        $region92: #{_lambda_.1} parent=75 // pred_fallthru
          _
        %p542 = scmp.lt.s32.totalorder %s30, 1
        %s543 = scalar_select %p542, %s30, 1
        %s544 = smul.addr %s543, 8
        %s545 = scalar_lea.vmem %s0, %s544
        %p546 = pneg %p51
        %p547 = pneg %p48
        %p548 = scmp.lt.s32.totalorder %s30, 1
        %s549 = scalar_select %p548, %s30, 1
        %s550 = smul.addr %s549, 8
        %s551 = scalar_lea.vmem %s1, %s550
        %p552 = pneg %p77
        %p553 = pneg %p74
        %p554 = scmp.lt.s32.totalorder %s30, 1
        %s555 = scalar_select %p554, %s30, 1
        %s556 = smul.addr %s555, 8
        %s557 = scalar_lea.vmem %s2, %s556
        %p558 = pneg %p103
        %p559 = pneg %p100
        %p560 = scmp.lt.s32.totalorder %s30, 1
        %s561 = scalar_select %p560, %s30, 1
        %s562 = smul.addr %s561, 8
        %s563 = scalar_lea.vmem %s3, %s562
        %p564 = pneg %p129
        %p565 = pneg %p126
        %p566 = scmp.lt.s32.totalorder %s30, 1
        %s567 = scalar_select %p566, %s30, 1
        %s568 = smul.addr %s567, 8
        %s569 = scalar_lea.vmem %s4, %s568
        %p570 = pneg %p155
        %p571 = pneg %p152
        %p572 = pneg %p176
        %p573 = pneg %p173
        %p574 = pneg %p197
        %p575 = pneg %p194
        %p576 = pneg %p218
        %p577 = pneg %p215
        %p578 = pneg %p239
        %p579 = pneg %p236
        %p580 = pneg %p260
        %p581 = pneg %p257
        %p582 = pneg %p281
        %p583 = pneg %p278
        %p584 = pneg %p302
        %p585 = pneg %p299
        %p586 = pneg %p323
        %p587 = pneg %p320
        %p588 = pneg %p344
        %p589 = pneg %p341
        %p590 = pneg %p370
        %p591 = pneg %p367
        %p592 = scmp.lt.s32.totalorder %s30, 1
        %s593 = scalar_select %p592, %s30, 1
        %s594 = smul.addr %s593, 8
        %s595 = scalar_lea.vmem %s14, %s594
        %p596 = pneg %p396
        %p597 = pneg %p393
        %p598 = scmp.lt.s32.totalorder %s30, 1
        %s599 = scalar_select %p598, %s30, 1
        %s600 = smul.addr %s599, 8
        %s601 = scalar_lea.vmem %s15, %s600
        %p602 = scmp.lt.s32.totalorder %s30, 1
        %s603 = scalar_select %p602, %s30, 1
        %s604 = smul.addr %s603, 8
        %s605 = scalar_lea.vmem %s0, %s604
        %p606 = scmp.lt.s32.totalorder %s30, 1
        %s607 = scalar_select %p606, %s30, 1
        %s608 = smul.addr %s607, 8
        %s609 = scalar_lea.vmem %s1, %s608
        %p610 = scmp.lt.s32.totalorder %s30, 1
        %s611 = scalar_select %p610, %s30, 1
        %s612 = smul.addr %s611, 8
        %s613 = scalar_lea.vmem %s2, %s612
        %p614 = scmp.lt.s32.totalorder %s30, 1
        %s615 = scalar_select %p614, %s30, 1
        %s616 = smul.addr %s615, 8
        %s617 = scalar_lea.vmem %s3, %s616
        %p618 = scmp.lt.s32.totalorder %s30, 1
        %s619 = scalar_select %p618, %s30, 1
        %s620 = smul.addr %s619, 8
        %s621 = scalar_lea.vmem %s4, %s620
        %p622 = scmp.lt.s32.totalorder %s30, 1
        %s623 = scalar_select %p622, %s30, 1
        %s624 = smul.addr %s623, 8
        %s625 = scalar_lea.vmem %s14, %s624
        %p626 = scmp.lt.s32.totalorder %s30, 1
        %s627 = scalar_select %p626, %s30, 1
        %s628 = smul.addr %s627, 8
        %s629 = scalar_lea.vmem %s15, %s628
        %v630 = vld [vmem:[#allocation6] sm:$0xff]
        %v631 = vld [vmem:[#allocation6 + $0x8] sm:$0xff]
        %v632 = vld [vmem:[#allocation6 + $0x10] sm:$0xff]
        %v633 = vld [vmem:[#allocation6 + $0x18] sm:$0xff]
        %v634 = vld [vmem:[#allocation6 + $0x20] sm:$0xff]
        %v635 = vld [vmem:[#allocation6 + $0x28] sm:$0xff]
        %v636 = vld [vmem:[#allocation6 + $0x30] sm:$0xff]
        %v637 = vld [vmem:[#allocation6 + $0x38] sm:$0xff]
        %v638 = vld [vmem:[#allocation6 + $0x40] sm:$0xff]
        %v639 = vld [vmem:[#allocation6 + $0x48] sm:$0xff]
        %v640 = vld [vmem:[#allocation6 + $0x50] sm:$0xff]
        %v641 = vld [vmem:[#allocation6 + $0x58] sm:$0xff]
        %v642 = vld [vmem:[#allocation6 + $0x60] sm:$0xff]
        %v643 = vld [vmem:[#allocation6 + $0x68] sm:$0xff]
        %v644 = vld [vmem:[#allocation6 + $0x70] sm:$0xff]
        %v645 = vld [vmem:[#allocation6 + $0x78] sm:$0xff]
        %v646 = vld [vmem:[#allocation6 + $0x80] sm:$0xff]
        %v647 = vld [vmem:[#allocation6 + $0x88] sm:$0xff]
        %v648 = vld [vmem:[#allocation6 + $0x90] sm:$0xff]
        %v649 = vld [vmem:[#allocation6 + $0x98] sm:$0xff]
        %v650 = vld [vmem:[%s10] sm:$0xff]
        %v651 = vld [vmem:[%s10 + $0x8] sm:$0xff]
        %v652 = vld [vmem:[%s10 + $0x10] sm:$0xf]
        %v653 = vld [vmem:[%s605] sm:$0xff]
        %v654 = vld [vmem:[#allocation2] sm:$0xf]
        %v655 = vld [vmem:[#allocation7] sm:$0x1]
        %v657 = vperm.slane %v655, 0
        %vm659 = vcmask 31744
        %v661 = vsel %vm659, %v653, 0
        %vm663 = vcmask 1043456
        %v665 = vsel %vm663, %v654, 0
        %667 = vmatpush.msra.mxu0 0.0
        %668 = vmatpush.msra.mxu0 0.0
        %669 = vmatpush.msra.mxu0 0.0
        %670 = vmatpush.msra.mxu0 0.0
        %671 = vmatpush.msra.mxu0 0.0
        %672 = vmatpush.msra.mxu0 0.0
        %673 = vmatpush.msra.mxu0 0.0
        %674 = vmatpush.msra.mxu0 0.0
        %675 = vmatpush.msra.mxu0 0.0
        %676 = vmatpush.msra.mxu0 0.0
        %677 = vmatpush.msra.mxu0 0.0
        %678 = vmatpush.msra.mxu0 0.0
        %679 = vmatpush.msra.mxu0 0.0
        %680 = vmatpush.msra.mxu0 0.0
        %681 = vmatpush.msra.mxu0 0.0
        %682 = vmatpush.msra.mxu0 %v665
        %683 = vmatmul.f32.gmra.mxu0 %v661
        %v684 = vpop.f32.mrf.mxu0
        %v685 = vadd.f32 %v657, %v684
        %686 = vdwg.mxu0
        %v687 = vmax.f32 %v685, 0.0
        %v688 = vld [vmem:[%s8] sm:$0xff]
        %v689 = vld [vmem:[%s8 + $0x8] sm:$0xff]
        %690 = vrot.lane.b32.xlu0 %v657, 112
        %v691 = vpop.permute.xlu0 %690
        %vm693 = vcmask 130048
        %v695 = vsel %vm693, %v687, 0
        %697 = vmatpush.msra.mxu0 0.0
        %698 = vmatpush.msra.mxu0 0.0
        %699 = vmatpush.msra.mxu0 0.0
        %700 = vmatpush.msra.mxu0 0.0
        %701 = vmatpush.msra.mxu0 0.0
        %702 = vmatpush.msra.mxu0 0.0
        %703 = vmatpush.msra.mxu0 0.0
        %704 = vmatpush.msra.mxu0 0.0
        %705 = vmatpush.msra.mxu0 0.0
        %706 = vmatpush.msra.mxu0 0.0
        %707 = vmatpush.msra.mxu0 0.0
        %708 = vmatpush.msra.mxu0 0.0
        %709 = vmatpush.msra.mxu0 0.0
        %710 = vmatpush.msra.mxu0 0.0
        %711 = vmatpush.msra.mxu0 %v689
        %712 = vmatpush.msra.mxu0 %v688
        %713 = vmatmul.f32.gmra.mxu0 %v695
        %v714 = vpop.f32.mrf.mxu0
        %v715 = vadd.f32 %v691, %v714
        %716 = vdwg.mxu0
        %v717 = vld [vmem:[%s621] sm:$0xff]
        %v718 = vmul.f32 %v715, 0.5
        %v719 = vmul.f32 %v718, 1.442695
        %v720 = vpow.pop %v719
        %722 = vrot.lane.b32.xlu0 %v720, 124
        %v723 = vpop.permute.xlu0 %722
        %v725 = vmul.f32 %v717, %v723
        %v726 = vadd.f32 %v715, %v725
        %v727 = vld [vmem:[#allocation4] sm:$0xf]
        %728 = vrot.lane.b32.xlu0 %v657, 104
        %v729 = vpop.permute.xlu0 %728
        %v732 = vsel %vm659, %v726, 0
        %v735 = vsel %vm663, %v727, 0
        %737 = vmatpush.msra.mxu0 0.0
        %738 = vmatpush.msra.mxu0 0.0
        %739 = vmatpush.msra.mxu0 0.0
        %740 = vmatpush.msra.mxu0 0.0
        %741 = vmatpush.msra.mxu0 0.0
        %742 = vmatpush.msra.mxu0 0.0
        %743 = vmatpush.msra.mxu0 0.0
        %744 = vmatpush.msra.mxu0 0.0
        %745 = vmatpush.msra.mxu0 0.0
        %746 = vmatpush.msra.mxu0 0.0
        %747 = vmatpush.msra.mxu0 0.0
        %748 = vmatpush.msra.mxu0 0.0
        %749 = vmatpush.msra.mxu0 0.0
        %750 = vmatpush.msra.mxu0 0.0
        %751 = vmatpush.msra.mxu0 0.0
        %752 = vmatpush.msra.mxu0 %v735
        %753 = vmatmul.f32.gmra.mxu0 %v732
        %v754 = vpop.f32.mrf.mxu0
        %v755 = vadd.f32 %v729, %v754
        %756 = vdwg.mxu0
        %v757 = vmax.f32 %v755, 0.0
        %760 = vrot.lane.b32.xlu0 %v688, 120
        %v761 = vpop.permute.xlu0 %760
        %762 = vrot.lane.b32.xlu0 %v689, 120
        %v763 = vpop.permute.xlu0 %762
        %766 = vrot.lane.b32.xlu0 %v657, 88
        %v767 = vpop.permute.xlu0 %766
        %v770 = vsel %vm693, %v757, 0
        %772 = vmatpush.msra.mxu0 0.0
        %773 = vmatpush.msra.mxu0 0.0
        %774 = vmatpush.msra.mxu0 0.0
        %775 = vmatpush.msra.mxu0 0.0
        %776 = vmatpush.msra.mxu0 0.0
        %777 = vmatpush.msra.mxu0 0.0
        %778 = vmatpush.msra.mxu0 0.0
        %779 = vmatpush.msra.mxu0 0.0
        %780 = vmatpush.msra.mxu0 0.0
        %781 = vmatpush.msra.mxu0 0.0
        %782 = vmatpush.msra.mxu0 0.0
        %783 = vmatpush.msra.mxu0 0.0
        %784 = vmatpush.msra.mxu0 0.0
        %785 = vmatpush.msra.mxu0 0.0
        %786 = vmatpush.msra.mxu0 %v763
        %787 = vmatpush.msra.mxu0 %v761
        %788 = vmatmul.f32.gmra.mxu0 %v770
        %v789 = vpop.f32.mrf.mxu0
        %v790 = vadd.f32 %v767, %v789
        %791 = vdwg.mxu0
        %792 = vrot.lane.b32.xlu0 %v726, 4
        %v793 = vpop.permute.xlu0 %792
        %796 = vrot.lane.b32.xlu0 %v715, 8
        %v797 = vpop.permute.xlu0 %796
        %v799 = vsel %vm659, %v790, %v793
        %vm800 = vcmask 64512
        %v801 = vsel %vm800, %v799, %v797
        %vm802 = vcmask 97280
        %v803 = vsel %vm802, %v801, %v797
        %804 = vst.msk [vmem:[%s625] sm:$0xff] %vm693, %v803
        %v806 = vrot.slane %v650, 4
        %v807 = vsel %vm663, %v806, 0
        %809 = vmatpush.msra.mxu0 0.0
        %810 = vmatpush.msra.mxu0 0.0
        %811 = vmatpush.msra.mxu0 0.0
        %812 = vmatpush.msra.mxu0 0.0
        %813 = vmatpush.msra.mxu0 0.0
        %814 = vmatpush.msra.mxu0 0.0
        %815 = vmatpush.msra.mxu0 0.0
        %816 = vmatpush.msra.mxu0 0.0
        %817 = vmatpush.msra.mxu0 0.0
        %818 = vmatpush.msra.mxu0 0.0
        %819 = vmatpush.msra.mxu0 0.0
        %820 = vmatpush.msra.mxu0 0.0
        %821 = vmatpush.msra.mxu0 0.0
        %822 = vmatpush.msra.mxu0 0.0
        %823 = vmatpush.msra.mxu0 0.0
        %824 = vmatpush.msra.mxu0 %v807
        %825 = vmatmul.f32.gmra.mxu0 %v732
        %v826 = vpop.f32.mrf.mxu0
        %v827 = vadd.f32 0.0, %v826
        %828 = vdwg.mxu0
        %v829 = vsel %vm663, %v650, 0
        %831 = vmatpush.msra.mxu0 0.0
        %832 = vmatpush.msra.mxu0 0.0
        %833 = vmatpush.msra.mxu0 0.0
        %834 = vmatpush.msra.mxu0 0.0
        %835 = vmatpush.msra.mxu0 0.0
        %836 = vmatpush.msra.mxu0 0.0
        %837 = vmatpush.msra.mxu0 0.0
        %838 = vmatpush.msra.mxu0 0.0
        %839 = vmatpush.msra.mxu0 0.0
        %840 = vmatpush.msra.mxu0 0.0
        %841 = vmatpush.msra.mxu0 0.0
        %842 = vmatpush.msra.mxu0 0.0
        %843 = vmatpush.msra.mxu0 0.0
        %844 = vmatpush.msra.mxu0 0.0
        %845 = vmatpush.msra.mxu0 0.0
        %846 = vmatpush.msra.mxu0 %v829
        %847 = vmatmul.f32.gmra.mxu0 %v661
        %v848 = vpop.f32.mrf.mxu0
        %v849 = vadd.f32 %v827, %v848
        %850 = vdwg.mxu0
        %v851 = vld [vmem:[%s609] sm:$0xff]
        %v853 = vrot.slane %v651, 4
        %v855 = vsel %vm659, %v851, 0
        %v857 = vsel %vm663, %v853, 0
        %859 = vmatpush.msra.mxu0 0.0
        %860 = vmatpush.msra.mxu0 0.0
        %861 = vmatpush.msra.mxu0 0.0
        %862 = vmatpush.msra.mxu0 0.0
        %863 = vmatpush.msra.mxu0 0.0
        %864 = vmatpush.msra.mxu0 0.0
        %865 = vmatpush.msra.mxu0 0.0
        %866 = vmatpush.msra.mxu0 0.0
        %867 = vmatpush.msra.mxu0 0.0
        %868 = vmatpush.msra.mxu0 0.0
        %869 = vmatpush.msra.mxu0 0.0
        %870 = vmatpush.msra.mxu0 0.0
        %871 = vmatpush.msra.mxu0 0.0
        %872 = vmatpush.msra.mxu0 0.0
        %873 = vmatpush.msra.mxu0 0.0
        %874 = vmatpush.msra.mxu0 %v857
        %875 = vmatmul.f32.gmra.mxu0 %v855
        %v876 = vpop.f32.mrf.mxu0
        %v877 = vadd.f32 0.0, %v876
        %878 = vdwg.mxu0
        %v879 = vadd.f32 %v849, %v877
        %v880 = vld [vmem:[%s5] sm:$0xff]
        %v881 = vadd.f32 %v879, %v880
        %v882 = vld [vmem:[#allocation7] sm:$0x3]
        %v884 = vperm.slane %v882, 0
        %v885 = vperm.slane %v882, 1
        %886 = vrot.lane.b32.xlu0 %v884, 84
        %v887 = vpop.permute.xlu0 %886
        %888 = vrot.lane.b32.xlu0 %v885, 84
        %v889 = vpop.permute.xlu0 %888
        %vm890 = vcmask 687104
        %v891 = vsel %vm890, %v887, %v889
        %vm893 = vcmask 261120
        %v895 = vsel %vm893, %v881, 0
        %897 = vmatpush.msra.mxu0 0.0
        %898 = vmatpush.msra.mxu0 0.0
        %899 = vmatpush.msra.mxu0 0.0
        %900 = vmatpush.msra.mxu0 0.0
        %901 = vmatpush.msra.mxu0 0.0
        %902 = vmatpush.msra.mxu0 0.0
        %903 = vmatpush.msra.mxu0 0.0
        %904 = vmatpush.msra.mxu0 0.0
        %905 = vmatpush.msra.mxu0 0.0
        %906 = vmatpush.msra.mxu0 0.0
        %907 = vmatpush.msra.mxu0 0.0
        %908 = vmatpush.msra.mxu0 0.0
        %909 = vmatpush.msra.mxu0 %v645
        %910 = vmatpush.msra.mxu0 %v640
        %911 = vmatpush.msra.mxu0 %v635
        %912 = vmatpush.msra.mxu0 %v630
        %913 = vmatmul.f32.gmra.mxu0 %v895
        %v914 = vpop.f32.mrf.mxu0
        %v915 = vadd.f32 %v891, %v914
        %916 = vdwg.mxu0
        %918 = vrot.lane.b32.xlu0 %v915, 96
        %v919 = vpop.permute.xlu0 %918
        %v920 = vsel %vm693, %v915, 0
        %v922 = vsel %vm693, %v919, 0
        %924 = vmatpush.xpose.msra.mxu0 0.0
        %925 = vmatpush.xpose.msra.mxu0 0.0
        %926 = vmatpush.xpose.msra.mxu0 0.0
        %927 = vmatpush.xpose.msra.mxu0 0.0
        %928 = vmatpush.xpose.msra.mxu0 0.0
        %929 = vmatpush.xpose.msra.mxu0 0.0
        %930 = vmatpush.xpose.msra.mxu0 0.0
        %931 = vmatpush.xpose.msra.mxu0 0.0
        %932 = vmatpush.xpose.msra.mxu0 0.0
        %933 = vmatpush.xpose.msra.mxu0 0.0
        %934 = vmatpush.xpose.msra.mxu0 0.0
        %935 = vmatpush.xpose.msra.mxu0 0.0
        %936 = vmatpush.xpose.msra.mxu0 0.0
        %937 = vmatpush.xpose.msra.mxu0 0.0
        %938 = vmatpush.xpose.msra.mxu0 0.0
        %939 = vmatpush.xpose.msra.mxu0 %v922
        %940 = vmatmul.f32.gmra.mxu0 %v920
        %v941 = vpop.f32.mrf.mxu0
        %v942 = vadd.f32 0.0, %v941
        %943 = vdwg.mxu0
        %v944 = vmul.f32 %v942, 0.25
        %v945 = vsel %vm800, %v944, -inf
        %946 = vmax.xlane.f32.xlu0 %v945
        %v947 = vpop.xlane.xlu0 %946
        %v948 = vsub.f32 %v944, %v947
        %v949 = vmul.f32 %v948, 1.442695
        %v950 = vpow.pop %v949
        %v951 = vsel %vm800, %v950, 0.0
        %952 = vadd.xlane.f32.xlu0 %v951
        %v953 = vpop.xlane.xlu0 %952
        %v954 = vrcp.pop %v953
        %v955 = vmul.f32 %v950, %v954
        %956 = vrot.lane.b32.xlu0 %v915, 64
        %v957 = vpop.permute.xlu0 %956
        %v960 = vsel %vm800, %v955, 0
        %962 = vmatpush.msra.mxu0 0.0
        %963 = vmatpush.msra.mxu0 0.0
        %964 = vmatpush.msra.mxu0 0.0
        %965 = vmatpush.msra.mxu0 0.0
        %966 = vmatpush.msra.mxu0 0.0
        %967 = vmatpush.msra.mxu0 0.0
        %968 = vmatpush.msra.mxu0 0.0
        %969 = vmatpush.msra.mxu0 0.0
        %970 = vmatpush.msra.mxu0 0.0
        %971 = vmatpush.msra.mxu0 0.0
        %972 = vmatpush.msra.mxu0 0.0
        %973 = vmatpush.msra.mxu0 0.0
        %974 = vmatpush.msra.mxu0 0.0
        %975 = vmatpush.msra.mxu0 0.0
        %976 = vmatpush.msra.mxu0 0.0
        %977 = vmatpush.msra.mxu0 %v957
        %978 = vmatmul.f32.gmra.mxu0 %v960
        %v979 = vpop.f32.mrf.mxu0
        %v980 = vadd.f32 0.0, %v979
        %981 = vdwg.mxu0
        %982 = vrot.lane.b32.xlu0 %v915, 112
        %v983 = vpop.permute.xlu0 %982
        %984 = vrot.lane.b32.xlu0 %v915, 80
        %v985 = vpop.permute.xlu0 %984
        %v986 = vsel %vm693, %v983, 0
        %v988 = vsel %vm693, %v985, 0
        %990 = vmatpush.xpose.msra.mxu0 0.0
        %991 = vmatpush.xpose.msra.mxu0 0.0
        %992 = vmatpush.xpose.msra.mxu0 0.0
        %993 = vmatpush.xpose.msra.mxu0 0.0
        %994 = vmatpush.xpose.msra.mxu0 0.0
        %995 = vmatpush.xpose.msra.mxu0 0.0
        %996 = vmatpush.xpose.msra.mxu0 0.0
        %997 = vmatpush.xpose.msra.mxu0 0.0
        %998 = vmatpush.xpose.msra.mxu0 0.0
        %999 = vmatpush.xpose.msra.mxu0 0.0
        %1000 = vmatpush.xpose.msra.mxu0 0.0
        %1001 = vmatpush.xpose.msra.mxu0 0.0
        %1002 = vmatpush.xpose.msra.mxu0 0.0
        %1003 = vmatpush.xpose.msra.mxu0 0.0
        %1004 = vmatpush.xpose.msra.mxu0 0.0
        %1005 = vmatpush.xpose.msra.mxu0 %v988
        %1006 = vmatmul.f32.gmra.mxu0 %v986
        %v1007 = vpop.f32.mrf.mxu0
        %v1008 = vadd.f32 0.0, %v1007
        %1009 = vdwg.mxu0
        %v1010 = vmul.f32 %v1008, 0.25
        %v1011 = vsel %vm800, %v1010, -inf
        %1012 = vmax.xlane.f32.xlu0 %v1011
        %v1013 = vpop.xlane.xlu0 %1012
        %v1014 = vsub.f32 %v1010, %v1013
        %v1015 = vmul.f32 %v1014, 1.442695
        %v1016 = vpow.pop %v1015
        %v1017 = vsel %vm800, %v1016, 0.0
        %1018 = vadd.xlane.f32.xlu0 %v1017
        %v1019 = vpop.xlane.xlu0 %1018
        %v1020 = vrcp.pop %v1019
        %v1021 = vmul.f32 %v1016, %v1020
        %1022 = vrot.lane.b32.xlu0 %v915, 48
        %v1023 = vpop.permute.xlu0 %1022
        %v1026 = vsel %vm800, %v1021, 0
        %1028 = vmatpush.msra.mxu0 0.0
        %1029 = vmatpush.msra.mxu0 0.0
        %1030 = vmatpush.msra.mxu0 0.0
        %1031 = vmatpush.msra.mxu0 0.0
        %1032 = vmatpush.msra.mxu0 0.0
        %1033 = vmatpush.msra.mxu0 0.0
        %1034 = vmatpush.msra.mxu0 0.0
        %1035 = vmatpush.msra.mxu0 0.0
        %1036 = vmatpush.msra.mxu0 0.0
        %1037 = vmatpush.msra.mxu0 0.0
        %1038 = vmatpush.msra.mxu0 0.0
        %1039 = vmatpush.msra.mxu0 0.0
        %1040 = vmatpush.msra.mxu0 0.0
        %1041 = vmatpush.msra.mxu0 0.0
        %1042 = vmatpush.msra.mxu0 0.0
        %1043 = vmatpush.msra.mxu0 %v1023
        %1044 = vmatmul.f32.gmra.mxu0 %v1026
        %v1045 = vpop.f32.mrf.mxu0
        %v1046 = vadd.f32 0.0, %v1045
        %1047 = vdwg.mxu0
        %1049 = vrot.lane.b32.xlu0 %v1046, 16
        %v1050 = vpop.permute.xlu0 %1049
        %v1052 = vsel %vm693, %v980, %v1050
        %1057 = vrot.lane.b32.xlu0 %v630, 32
        %v1058 = vpop.permute.xlu0 %1057
        %1059 = vrot.lane.b32.xlu0 %v635, 32
        %v1060 = vpop.permute.xlu0 %1059
        %1061 = vrot.lane.b32.xlu0 %v640, 32
        %v1062 = vpop.permute.xlu0 %1061
        %1063 = vrot.lane.b32.xlu0 %v645, 32
        %v1064 = vpop.permute.xlu0 %1063
        %v1070 = vsel %vm893, %v1052, 0
        %1072 = vmatpush.msra.mxu0 0.0
        %1073 = vmatpush.msra.mxu0 0.0
        %1074 = vmatpush.msra.mxu0 0.0
        %1075 = vmatpush.msra.mxu0 0.0
        %1076 = vmatpush.msra.mxu0 0.0
        %1077 = vmatpush.msra.mxu0 0.0
        %1078 = vmatpush.msra.mxu0 0.0
        %1079 = vmatpush.msra.mxu0 0.0
        %1080 = vmatpush.msra.mxu0 0.0
        %1081 = vmatpush.msra.mxu0 0.0
        %1082 = vmatpush.msra.mxu0 0.0
        %1083 = vmatpush.msra.mxu0 0.0
        %1084 = vmatpush.msra.mxu0 %v1064
        %1085 = vmatpush.msra.mxu0 %v1062
        %1086 = vmatpush.msra.mxu0 %v1060
        %1087 = vmatpush.msra.mxu0 %v1058
        %1088 = vmatmul.f32.gmra.mxu0 %v1070
        %v1089 = vpop.f32.mrf.mxu0
        %v1090 = vadd.f32 0.0, %v1089
        %1091 = vdwg.mxu0
        %v1092 = vadd.f32 %v881, %v1090
        %v1093 = vld [vmem:[#allocation7 + $0x1] sm:$0x1]
        %v1095 = vperm.slane %v1093, 0
        %1096 = vrot.lane.b32.xlu0 %v1095, 116
        %v1097 = vpop.permute.xlu0 %1096
        %v1099 = vadd.f32 %v1092, %v1097
        %v1100 = vsel %vm893, %v1099, 0.0
        %1101 = vadd.xlane.f32.xlu0 %v1100
        %v1102 = vpop.xlane.xlu0 %1101
        %v1103 = vrcp.pop 32.0
        %v1104 = vmul.f32 32.0, %v1103
        %v1105 = vsub.f32 1.0, %v1104
        %v1106 = vmul.f32 %v1103, %v1105
        %v1107 = vadd.f32 %v1103, %v1106
        %vm1108 = vweird.f32 %v1103
        %v1109 = vsel %vm1108, %v1103, %v1107
        %v1110 = vmul.f32 %v1102, %v1109
        %v1111 = vsub.f32 %v1099, %v1110
        %v1112 = vmul.f32 %v1111, %v1111
        %v1113 = vsel %vm893, %v1112, 0.0
        %1114 = vadd.xlane.f32.xlu0 %v1113
        %v1115 = vpop.xlane.xlu0 %1114
        %v1116 = vmul.f32 %v1115, %v1109
        %v1117 = vadd.f32 %v1116, 1e-05
        %v1118 = vrsqrt.pop %v1117
        %v1119 = vmul.f32 %v1118, %v1117
        %v1120 = vmul.f32 %v1119, %v1118
        %v1121 = vmul.f32 0.5, %v1120
        %v1122 = vsub.f32 1.5, %v1121
        %v1123 = vmul.f32 %v1118, %v1122
        %vm1124 = vweird.f32 %v1117
        %vm1125 = vweird.f32 %v1118
        %vm1126 = vmor %vm1124, %vm1125
        %v1127 = vsel %vm1126, %v1118, %v1123
        %v1128 = vmul.f32 %v1111, %v1127
        %1129 = vrot.lane.b32.xlu0 %v1095, 84
        %v1130 = vpop.permute.xlu0 %1129
        %v1132 = vmul.f32 %v1128, %v1130
        %1133 = vrot.lane.b32.xlu0 %v1095, 52
        %v1134 = vpop.permute.xlu0 %1133
        %v1136 = vadd.f32 %v1132, %v1134
        %v1137 = vld [vmem:[%s12] sm:$0xff]
        %v1138 = vld [vmem:[%s12 + $0x8] sm:$0xff]
        %v1139 = vld [vmem:[%s12 + $0x10] sm:$0xff]
        %v1140 = vld [vmem:[%s12 + $0x18] sm:$0xff]
        %v1141 = vld [vmem:[%s12 + $0x20] sm:$0xff]
        %v1142 = vld [vmem:[%s12 + $0x28] sm:$0xff]
        %v1143 = vld [vmem:[%s12 + $0x30] sm:$0xff]
        %v1144 = vld [vmem:[%s12 + $0x38] sm:$0xff]
        %v1145 = vld [vmem:[#allocation7 + $0x1] sm:$0x3]
        %v1147 = vperm.slane %v1145, 0
        %v1148 = vperm.slane %v1145, 1
        %1149 = vrot.lane.b32.xlu0 %v1147, 20
        %v1150 = vpop.permute.xlu0 %1149
        %1151 = vrot.lane.b32.xlu0 %v1148, 20
        %v1152 = vpop.permute.xlu0 %1151
        %vm1153 = vcmask 162816
        %v1154 = vsel %vm1153, %v1150, %v1152
        %v1157 = vsel %vm893, %v1136, 0
        %1159 = vmatpush.msra.mxu0 0.0
        %1160 = vmatpush.msra.mxu0 0.0
        %1161 = vmatpush.msra.mxu0 0.0
        %1162 = vmatpush.msra.mxu0 0.0
        %1163 = vmatpush.msra.mxu0 0.0
        %1164 = vmatpush.msra.mxu0 0.0
        %1165 = vmatpush.msra.mxu0 0.0
        %1166 = vmatpush.msra.mxu0 0.0
        %1167 = vmatpush.msra.mxu0 0.0
        %1168 = vmatpush.msra.mxu0 0.0
        %1169 = vmatpush.msra.mxu0 0.0
        %1170 = vmatpush.msra.mxu0 0.0
        %1171 = vmatpush.msra.mxu0 %v646
        %1172 = vmatpush.msra.mxu0 %v641
        %1173 = vmatpush.msra.mxu0 %v636
        %1174 = vmatpush.msra.mxu0 %v631
        %1175 = vmatmul.f32.gmra.mxu0 %v1157
        %v1176 = vpop.f32.mrf.mxu0
        %v1177 = vadd.f32 %v1154, %v1176
        %1178 = vdwg.mxu0
        %v1179 = vmax.f32 %v1177, 0.0
        %v1180 = vld [vmem:[#allocation7 + $0x2] sm:$0x1]
        %v1182 = vperm.slane %v1180, 0
        %1183 = vrot.lane.b32.xlu0 %v1182, 84
        %v1184 = vpop.permute.xlu0 %1183
        %vm1186 = vcmask 523264
        %v1188 = vsel %vm1186, %v1179, 0
        %1190 = vmatpush.msra.mxu0 0.0
        %1191 = vmatpush.msra.mxu0 0.0
        %1192 = vmatpush.msra.mxu0 0.0
        %1193 = vmatpush.msra.mxu0 0.0
        %1194 = vmatpush.msra.mxu0 0.0
        %1195 = vmatpush.msra.mxu0 0.0
        %1196 = vmatpush.msra.mxu0 0.0
        %1197 = vmatpush.msra.mxu0 0.0
        %1198 = vmatpush.msra.mxu0 %v1144
        %1199 = vmatpush.msra.mxu0 %v1143
        %1200 = vmatpush.msra.mxu0 %v1142
        %1201 = vmatpush.msra.mxu0 %v1141
        %1202 = vmatpush.msra.mxu0 %v1140
        %1203 = vmatpush.msra.mxu0 %v1139
        %1204 = vmatpush.msra.mxu0 %v1138
        %1205 = vmatpush.msra.mxu0 %v1137
        %1206 = vmatmul.f32.gmra.mxu0 %v1188
        %v1207 = vpop.f32.mrf.mxu0
        %v1208 = vadd.f32 %v1184, %v1207
        %1209 = vdwg.mxu0
        %v1210 = vadd.f32 %v1136, %v1208
        %v1211 = vld [vmem:[#allocation7 + $0x2] sm:$0x3]
        %v1212 = vsel %vm893, %v1210, 0.0
        %1213 = vadd.xlane.f32.xlu0 %v1212
        %v1214 = vpop.xlane.xlu0 %1213
        %v1215 = vmul.f32 %v1214, %v1109
        %v1216 = vsub.f32 %v1210, %v1215
        %v1217 = vmul.f32 %v1216, %v1216
        %v1218 = vsel %vm893, %v1217, 0.0
        %1219 = vadd.xlane.f32.xlu0 %v1218
        %v1220 = vpop.xlane.xlu0 %1219
        %v1221 = vmul.f32 %v1220, %v1109
        %v1222 = vadd.f32 %v1221, 1e-05
        %v1223 = vrsqrt.pop %v1222
        %v1224 = vmul.f32 %v1223, %v1222
        %v1225 = vmul.f32 %v1224, %v1223
        %v1226 = vmul.f32 0.5, %v1225
        %v1227 = vsub.f32 1.5, %v1226
        %v1228 = vmul.f32 %v1223, %v1227
        %vm1229 = vweird.f32 %v1222
        %vm1230 = vweird.f32 %v1223
        %vm1231 = vmor %vm1229, %vm1230
        %v1232 = vsel %vm1231, %v1223, %v1228
        %v1233 = vmul.f32 %v1216, %v1232
        %1234 = vrot.lane.b32.xlu0 %v1182, 52
        %v1235 = vpop.permute.xlu0 %1234
        %v1237 = vmul.f32 %v1233, %v1235
        %v1239 = vperm.slane %v1211, 0
        %v1240 = vperm.slane %v1211, 1
        %1241 = vrot.lane.b32.xlu0 %v1239, 20
        %v1242 = vpop.permute.xlu0 %1241
        %1243 = vrot.lane.b32.xlu0 %v1240, 20
        %v1244 = vpop.permute.xlu0 %1243
        %v1245 = vsel %vm1153, %v1242, %v1244
        %v1247 = vadd.f32 %v1237, %v1245
        %v1248 = vld [vmem:[%s613] sm:$0xff]
        %v1249 = vld [vmem:[%s617] sm:$0xff]
        %v1251 = vsel %vm659, %v1249, 0
        %v1254 = vsel %vm663, %v652, 0
        %1256 = vmatpush.msra.mxu0 0.0
        %1257 = vmatpush.msra.mxu0 0.0
        %1258 = vmatpush.msra.mxu0 0.0
        %1259 = vmatpush.msra.mxu0 0.0
        %1260 = vmatpush.msra.mxu0 0.0
        %1261 = vmatpush.msra.mxu0 0.0
        %1262 = vmatpush.msra.mxu0 0.0
        %1263 = vmatpush.msra.mxu0 0.0
        %1264 = vmatpush.msra.mxu0 0.0
        %1265 = vmatpush.msra.mxu0 0.0
        %1266 = vmatpush.msra.mxu0 0.0
        %1267 = vmatpush.msra.mxu0 0.0
        %1268 = vmatpush.msra.mxu0 0.0
        %1269 = vmatpush.msra.mxu0 0.0
        %1270 = vmatpush.msra.mxu0 0.0
        %1271 = vmatpush.msra.mxu0 %v1254
        %1272 = vmatmul.f32.gmra.mxu0 %v1251
        %v1273 = vpop.f32.mrf.mxu0
        %v1274 = vadd.f32 0.0, %v1273
        %1275 = vdwg.mxu0
        %v1277 = vsel %vm659, %v1248, 0
        %v1279 = vsel %vm663, %v651, 0
        %1281 = vmatpush.msra.mxu0 0.0
        %1282 = vmatpush.msra.mxu0 0.0
        %1283 = vmatpush.msra.mxu0 0.0
        %1284 = vmatpush.msra.mxu0 0.0
        %1285 = vmatpush.msra.mxu0 0.0
        %1286 = vmatpush.msra.mxu0 0.0
        %1287 = vmatpush.msra.mxu0 0.0
        %1288 = vmatpush.msra.mxu0 0.0
        %1289 = vmatpush.msra.mxu0 0.0
        %1290 = vmatpush.msra.mxu0 0.0
        %1291 = vmatpush.msra.mxu0 0.0
        %1292 = vmatpush.msra.mxu0 0.0
        %1293 = vmatpush.msra.mxu0 0.0
        %1294 = vmatpush.msra.mxu0 0.0
        %1295 = vmatpush.msra.mxu0 0.0
        %1296 = vmatpush.msra.mxu0 %v1279
        %1297 = vmatmul.f32.gmra.mxu0 %v1277
        %v1298 = vpop.f32.mrf.mxu0
        %v1299 = vadd.f32 %v1274, %v1298
        %1300 = vdwg.mxu0
        %v1301 = vld [vmem:[%s6] sm:$0xff]
        %v1302 = vadd.f32 %v1299, %v1301
        %v1303 = vlaneseq
        %v1304 = vshrl.u32 %v1303, 7
        %v1305 = vlaneseq
        %v1306 = vand.u32 %v1305, 127
        %vm1307 = vcmp.le.s32.totalorder %v1306, %v1304
        %v1308 = vsel %vm1307, 0.0, -1e+30
        %v1309 = vld [vmem:[#allocation7 + $0x3] sm:$0x1]
        %v1311 = vperm.slane %v1309, 0
        %1320 = vrot.lane.b32.xlu0 %v631, 64
        %v1321 = vpop.permute.xlu0 %1320
        %1322 = vrot.lane.b32.xlu0 %v632, 64
        %v1323 = vpop.permute.xlu0 %1322
        %1324 = vrot.lane.b32.xlu0 %v636, 64
        %v1325 = vpop.permute.xlu0 %1324
        %1326 = vrot.lane.b32.xlu0 %v637, 64
        %v1327 = vpop.permute.xlu0 %1326
        %1328 = vrot.lane.b32.xlu0 %v641, 64
        %v1329 = vpop.permute.xlu0 %1328
        %1330 = vrot.lane.b32.xlu0 %v642, 64
        %v1331 = vpop.permute.xlu0 %1330
        %1332 = vrot.lane.b32.xlu0 %v646, 64
        %v1333 = vpop.permute.xlu0 %1332
        %1334 = vrot.lane.b32.xlu0 %v647, 64
        %v1335 = vpop.permute.xlu0 %1334
        %v1336 = vsel %vm1186, %v1321, %v1323
        %v1337 = vsel %vm1186, %v1325, %v1327
        %v1338 = vsel %vm1186, %v1329, %v1331
        %v1339 = vsel %vm1186, %v1333, %v1335
        %1344 = vrot.lane.b32.xlu0 %v1311, 116
        %v1345 = vpop.permute.xlu0 %1344
        %v1348 = vsel %vm893, %v1302, 0
        %1350 = vmatpush.msra.mxu0 0.0
        %1351 = vmatpush.msra.mxu0 0.0
        %1352 = vmatpush.msra.mxu0 0.0
        %1353 = vmatpush.msra.mxu0 0.0
        %1354 = vmatpush.msra.mxu0 0.0
        %1355 = vmatpush.msra.mxu0 0.0
        %1356 = vmatpush.msra.mxu0 0.0
        %1357 = vmatpush.msra.mxu0 0.0
        %1358 = vmatpush.msra.mxu0 0.0
        %1359 = vmatpush.msra.mxu0 0.0
        %1360 = vmatpush.msra.mxu0 0.0
        %1361 = vmatpush.msra.mxu0 0.0
        %1362 = vmatpush.msra.mxu0 %v1339
        %1363 = vmatpush.msra.mxu0 %v1338
        %1364 = vmatpush.msra.mxu0 %v1337
        %1365 = vmatpush.msra.mxu0 %v1336
        %1366 = vmatmul.f32.gmra.mxu0 %v1348
        %v1367 = vpop.f32.mrf.mxu0
        %v1368 = vadd.f32 %v1345, %v1367
        %1369 = vdwg.mxu0
        %1371 = vrot.lane.b32.xlu0 %v1368, 96
        %v1372 = vpop.permute.xlu0 %1371
        %v1373 = vsel %vm693, %v1368, 0
        %v1375 = vsel %vm693, %v1372, 0
        %1377 = vmatpush.xpose.msra.mxu0 0.0
        %1378 = vmatpush.xpose.msra.mxu0 0.0
        %1379 = vmatpush.xpose.msra.mxu0 0.0
        %1380 = vmatpush.xpose.msra.mxu0 0.0
        %1381 = vmatpush.xpose.msra.mxu0 0.0
        %1382 = vmatpush.xpose.msra.mxu0 0.0
        %1383 = vmatpush.xpose.msra.mxu0 0.0
        %1384 = vmatpush.xpose.msra.mxu0 0.0
        %1385 = vmatpush.xpose.msra.mxu0 0.0
        %1386 = vmatpush.xpose.msra.mxu0 0.0
        %1387 = vmatpush.xpose.msra.mxu0 0.0
        %1388 = vmatpush.xpose.msra.mxu0 0.0
        %1389 = vmatpush.xpose.msra.mxu0 0.0
        %1390 = vmatpush.xpose.msra.mxu0 0.0
        %1391 = vmatpush.xpose.msra.mxu0 0.0
        %1392 = vmatpush.xpose.msra.mxu0 %v1375
        %1393 = vmatmul.f32.gmra.mxu0 %v1373
        %v1394 = vpop.f32.mrf.mxu0
        %v1395 = vadd.f32 0.0, %v1394
        %1396 = vdwg.mxu0
        %v1397 = vmul.f32 %v1395, 0.25
        %v1398 = vadd.f32 %v1397, %v1308
        %v1399 = vsel %vm800, %v1398, -inf
        %1400 = vmax.xlane.f32.xlu0 %v1399
        %v1401 = vpop.xlane.xlu0 %1400
        %v1402 = vsub.f32 %v1398, %v1401
        %v1403 = vmul.f32 %v1402, 1.442695
        %v1404 = vpow.pop %v1403
        %v1405 = vsel %vm800, %v1404, 0.0
        %1406 = vadd.xlane.f32.xlu0 %v1405
        %v1407 = vpop.xlane.xlu0 %1406
        %v1408 = vrcp.pop %v1407
        %v1409 = vmul.f32 %v1404, %v1408
        %1410 = vrot.lane.b32.xlu0 %v1368, 64
        %v1411 = vpop.permute.xlu0 %1410
        %v1414 = vsel %vm800, %v1409, 0
        %1416 = vmatpush.msra.mxu0 0.0
        %1417 = vmatpush.msra.mxu0 0.0
        %1418 = vmatpush.msra.mxu0 0.0
        %1419 = vmatpush.msra.mxu0 0.0
        %1420 = vmatpush.msra.mxu0 0.0
        %1421 = vmatpush.msra.mxu0 0.0
        %1422 = vmatpush.msra.mxu0 0.0
        %1423 = vmatpush.msra.mxu0 0.0
        %1424 = vmatpush.msra.mxu0 0.0
        %1425 = vmatpush.msra.mxu0 0.0
        %1426 = vmatpush.msra.mxu0 0.0
        %1427 = vmatpush.msra.mxu0 0.0
        %1428 = vmatpush.msra.mxu0 0.0
        %1429 = vmatpush.msra.mxu0 0.0
        %1430 = vmatpush.msra.mxu0 0.0
        %1431 = vmatpush.msra.mxu0 %v1411
        %1432 = vmatmul.f32.gmra.mxu0 %v1414
        %v1433 = vpop.f32.mrf.mxu0
        %v1434 = vadd.f32 0.0, %v1433
        %1435 = vdwg.mxu0
        %1436 = vrot.lane.b32.xlu0 %v1368, 112
        %v1437 = vpop.permute.xlu0 %1436
        %1438 = vrot.lane.b32.xlu0 %v1368, 80
        %v1439 = vpop.permute.xlu0 %1438
        %v1440 = vsel %vm693, %v1437, 0
        %v1442 = vsel %vm693, %v1439, 0
        %1444 = vmatpush.xpose.msra.mxu0 0.0
        %1445 = vmatpush.xpose.msra.mxu0 0.0
        %1446 = vmatpush.xpose.msra.mxu0 0.0
        %1447 = vmatpush.xpose.msra.mxu0 0.0
        %1448 = vmatpush.xpose.msra.mxu0 0.0
        %1449 = vmatpush.xpose.msra.mxu0 0.0
        %1450 = vmatpush.xpose.msra.mxu0 0.0
        %1451 = vmatpush.xpose.msra.mxu0 0.0
        %1452 = vmatpush.xpose.msra.mxu0 0.0
        %1453 = vmatpush.xpose.msra.mxu0 0.0
        %1454 = vmatpush.xpose.msra.mxu0 0.0
        %1455 = vmatpush.xpose.msra.mxu0 0.0
        %1456 = vmatpush.xpose.msra.mxu0 0.0
        %1457 = vmatpush.xpose.msra.mxu0 0.0
        %1458 = vmatpush.xpose.msra.mxu0 0.0
        %1459 = vmatpush.xpose.msra.mxu0 %v1442
        %1460 = vmatmul.f32.gmra.mxu0 %v1440
        %v1461 = vpop.f32.mrf.mxu0
        %v1462 = vadd.f32 0.0, %v1461
        %1463 = vdwg.mxu0
        %v1464 = vmul.f32 %v1462, 0.25
        %v1465 = vadd.f32 %v1464, %v1308
        %v1466 = vsel %vm800, %v1465, -inf
        %1467 = vmax.xlane.f32.xlu0 %v1466
        %v1468 = vpop.xlane.xlu0 %1467
        %v1469 = vsub.f32 %v1465, %v1468
        %v1470 = vmul.f32 %v1469, 1.442695
        %v1471 = vpow.pop %v1470
        %v1472 = vsel %vm800, %v1471, 0.0
        %1473 = vadd.xlane.f32.xlu0 %v1472
        %v1474 = vpop.xlane.xlu0 %1473
        %v1475 = vrcp.pop %v1474
        %v1476 = vmul.f32 %v1471, %v1475
        %1477 = vrot.lane.b32.xlu0 %v1368, 48
        %v1478 = vpop.permute.xlu0 %1477
        %v1481 = vsel %vm800, %v1476, 0
        %1483 = vmatpush.msra.mxu0 0.0
        %1484 = vmatpush.msra.mxu0 0.0
        %1485 = vmatpush.msra.mxu0 0.0
        %1486 = vmatpush.msra.mxu0 0.0
        %1487 = vmatpush.msra.mxu0 0.0
        %1488 = vmatpush.msra.mxu0 0.0
        %1489 = vmatpush.msra.mxu0 0.0
        %1490 = vmatpush.msra.mxu0 0.0
        %1491 = vmatpush.msra.mxu0 0.0
        %1492 = vmatpush.msra.mxu0 0.0
        %1493 = vmatpush.msra.mxu0 0.0
        %1494 = vmatpush.msra.mxu0 0.0
        %1495 = vmatpush.msra.mxu0 0.0
        %1496 = vmatpush.msra.mxu0 0.0
        %1497 = vmatpush.msra.mxu0 0.0
        %1498 = vmatpush.msra.mxu0 %v1478
        %1499 = vmatmul.f32.gmra.mxu0 %v1481
        %v1500 = vpop.f32.mrf.mxu0
        %v1501 = vadd.f32 0.0, %v1500
        %1502 = vdwg.mxu0
        %1504 = vrot.lane.b32.xlu0 %v1501, 16
        %v1505 = vpop.permute.xlu0 %1504
        %v1507 = vsel %vm693, %v1434, %v1505
        %1508 = vrot.lane.b32.xlu0 %v632, 96
        %v1509 = vpop.permute.xlu0 %1508
        %1510 = vrot.lane.b32.xlu0 %v637, 96
        %v1511 = vpop.permute.xlu0 %1510
        %1512 = vrot.lane.b32.xlu0 %v642, 96
        %v1513 = vpop.permute.xlu0 %1512
        %1514 = vrot.lane.b32.xlu0 %v647, 96
        %v1515 = vpop.permute.xlu0 %1514
        %v1521 = vsel %vm893, %v1507, 0
        %1523 = vmatpush.msra.mxu0 0.0
        %1524 = vmatpush.msra.mxu0 0.0
        %1525 = vmatpush.msra.mxu0 0.0
        %1526 = vmatpush.msra.mxu0 0.0
        %1527 = vmatpush.msra.mxu0 0.0
        %1528 = vmatpush.msra.mxu0 0.0
        %1529 = vmatpush.msra.mxu0 0.0
        %1530 = vmatpush.msra.mxu0 0.0
        %1531 = vmatpush.msra.mxu0 0.0
        %1532 = vmatpush.msra.mxu0 0.0
        %1533 = vmatpush.msra.mxu0 0.0
        %1534 = vmatpush.msra.mxu0 0.0
        %1535 = vmatpush.msra.mxu0 %v1515
        %1536 = vmatpush.msra.mxu0 %v1513
        %1537 = vmatpush.msra.mxu0 %v1511
        %1538 = vmatpush.msra.mxu0 %v1509
        %1539 = vmatmul.f32.gmra.mxu0 %v1521
        %v1540 = vpop.f32.mrf.mxu0
        %v1541 = vadd.f32 0.0, %v1540
        %1542 = vdwg.mxu0
        %v1543 = vadd.f32 %v1302, %v1541
        %v1544 = vld [vmem:[#allocation7 + $0x3] sm:$0x3]
        %v1546 = vperm.slane %v1544, 0
        %v1547 = vperm.slane %v1544, 1
        %1548 = vrot.lane.b32.xlu0 %v1546, 20
        %v1549 = vpop.permute.xlu0 %1548
        %1550 = vrot.lane.b32.xlu0 %v1547, 20
        %v1551 = vpop.permute.xlu0 %1550
        %v1552 = vsel %vm1153, %v1549, %v1551
        %v1554 = vadd.f32 %v1543, %v1552
        %v1555 = vld [vmem:[#allocation7 + $0x4] sm:$0x1]
        %v1556 = vsel %vm893, %v1554, 0.0
        %1557 = vadd.xlane.f32.xlu0 %v1556
        %v1558 = vpop.xlane.xlu0 %1557
        %v1559 = vmul.f32 %v1558, %v1109
        %v1560 = vsub.f32 %v1554, %v1559
        %v1561 = vmul.f32 %v1560, %v1560
        %v1562 = vsel %vm893, %v1561, 0.0
        %1563 = vadd.xlane.f32.xlu0 %v1562
        %v1564 = vpop.xlane.xlu0 %1563
        %v1565 = vmul.f32 %v1564, %v1109
        %v1566 = vadd.f32 %v1565, 1e-05
        %v1567 = vrsqrt.pop %v1566
        %v1568 = vmul.f32 %v1567, %v1566
        %v1569 = vmul.f32 %v1568, %v1567
        %v1570 = vmul.f32 0.5, %v1569
        %v1571 = vsub.f32 1.5, %v1570
        %v1572 = vmul.f32 %v1567, %v1571
        %vm1573 = vweird.f32 %v1566
        %vm1574 = vweird.f32 %v1567
        %vm1575 = vmor %vm1573, %vm1574
        %v1576 = vsel %vm1575, %v1567, %v1572
        %v1577 = vmul.f32 %v1560, %v1576
        %v1579 = vperm.slane %v1555, 0
        %1580 = vrot.lane.b32.xlu0 %v1579, 116
        %v1581 = vpop.permute.xlu0 %1580
        %v1583 = vmul.f32 %v1577, %v1581
        %1584 = vrot.lane.b32.xlu0 %v1579, 84
        %v1585 = vpop.permute.xlu0 %1584
        %v1587 = vadd.f32 %v1583, %v1585
        %1592 = vrot.lane.b32.xlu0 %v1579, 52
        %v1593 = vpop.permute.xlu0 %1592
        %v1596 = vsel %vm893, %v1587, 0
        %1598 = vmatpush.msra.mxu0 0.0
        %1599 = vmatpush.msra.mxu0 0.0
        %1600 = vmatpush.msra.mxu0 0.0
        %1601 = vmatpush.msra.mxu0 0.0
        %1602 = vmatpush.msra.mxu0 0.0
        %1603 = vmatpush.msra.mxu0 0.0
        %1604 = vmatpush.msra.mxu0 0.0
        %1605 = vmatpush.msra.mxu0 0.0
        %1606 = vmatpush.msra.mxu0 0.0
        %1607 = vmatpush.msra.mxu0 0.0
        %1608 = vmatpush.msra.mxu0 0.0
        %1609 = vmatpush.msra.mxu0 0.0
        %1610 = vmatpush.msra.mxu0 %v1335
        %1611 = vmatpush.msra.mxu0 %v1331
        %1612 = vmatpush.msra.mxu0 %v1327
        %1613 = vmatpush.msra.mxu0 %v1323
        %1614 = vmatmul.f32.gmra.mxu0 %v1596
        %v1615 = vpop.f32.mrf.mxu0
        %v1616 = vadd.f32 %v1593, %v1615
        %1617 = vdwg.mxu0
        %v1618 = vld [vmem:[#allocation7 + $0x4] sm:$0x3]
        %v1620 = vperm.slane %v1618, 0
        %v1621 = vperm.slane %v1618, 1
        %1626 = vrot.lane.b32.xlu0 %v632, 32
        %v1627 = vpop.permute.xlu0 %1626
        %1628 = vrot.lane.b32.xlu0 %v633, 32
        %v1629 = vpop.permute.xlu0 %1628
        %1630 = vrot.lane.b32.xlu0 %v637, 32
        %v1631 = vpop.permute.xlu0 %1630
        %1632 = vrot.lane.b32.xlu0 %v638, 32
        %v1633 = vpop.permute.xlu0 %1632
        %1634 = vrot.lane.b32.xlu0 %v642, 32
        %v1635 = vpop.permute.xlu0 %1634
        %1636 = vrot.lane.b32.xlu0 %v643, 32
        %v1637 = vpop.permute.xlu0 %1636
        %1638 = vrot.lane.b32.xlu0 %v647, 32
        %v1639 = vpop.permute.xlu0 %1638
        %1640 = vrot.lane.b32.xlu0 %v648, 32
        %v1641 = vpop.permute.xlu0 %1640
        %v1642 = vsel %vm893, %v1627, %v1629
        %v1643 = vsel %vm893, %v1631, %v1633
        %v1644 = vsel %vm893, %v1635, %v1637
        %v1645 = vsel %vm893, %v1639, %v1641
        %1650 = vrot.lane.b32.xlu0 %v1620, 20
        %v1651 = vpop.permute.xlu0 %1650
        %1652 = vrot.lane.b32.xlu0 %v1621, 20
        %v1653 = vpop.permute.xlu0 %1652
        %v1654 = vsel %vm1153, %v1651, %v1653
        %v1657 = vsel %vm893, %v1247, 0
        %1659 = vmatpush.msra.mxu0 0.0
        %1660 = vmatpush.msra.mxu0 0.0
        %1661 = vmatpush.msra.mxu0 0.0
        %1662 = vmatpush.msra.mxu0 0.0
        %1663 = vmatpush.msra.mxu0 0.0
        %1664 = vmatpush.msra.mxu0 0.0
        %1665 = vmatpush.msra.mxu0 0.0
        %1666 = vmatpush.msra.mxu0 0.0
        %1667 = vmatpush.msra.mxu0 0.0
        %1668 = vmatpush.msra.mxu0 0.0
        %1669 = vmatpush.msra.mxu0 0.0
        %1670 = vmatpush.msra.mxu0 0.0
        %1671 = vmatpush.msra.mxu0 %v1645
        %1672 = vmatpush.msra.mxu0 %v1644
        %1673 = vmatpush.msra.mxu0 %v1643
        %1674 = vmatpush.msra.mxu0 %v1642
        %1675 = vmatmul.f32.gmra.mxu0 %v1657
        %v1676 = vpop.f32.mrf.mxu0
        %v1677 = vadd.f32 %v1654, %v1676
        %1678 = vdwg.mxu0
        %v1680 = vsel %vm693, %v1616, 0
        %v1683 = vsel %vm693, %v1677, 0
        %1685 = vmatpush.xpose.msra.mxu0 0.0
        %1686 = vmatpush.xpose.msra.mxu0 0.0
        %1687 = vmatpush.xpose.msra.mxu0 0.0
        %1688 = vmatpush.xpose.msra.mxu0 0.0
        %1689 = vmatpush.xpose.msra.mxu0 0.0
        %1690 = vmatpush.xpose.msra.mxu0 0.0
        %1691 = vmatpush.xpose.msra.mxu0 0.0
        %1692 = vmatpush.xpose.msra.mxu0 0.0
        %1693 = vmatpush.xpose.msra.mxu0 0.0
        %1694 = vmatpush.xpose.msra.mxu0 0.0
        %1695 = vmatpush.xpose.msra.mxu0 0.0
        %1696 = vmatpush.xpose.msra.mxu0 0.0
        %1697 = vmatpush.xpose.msra.mxu0 0.0
        %1698 = vmatpush.xpose.msra.mxu0 0.0
        %1699 = vmatpush.xpose.msra.mxu0 0.0
        %1700 = vmatpush.xpose.msra.mxu0 %v1683
        %1701 = vmatmul.f32.gmra.mxu0 %v1680
        %v1702 = vpop.f32.mrf.mxu0
        %v1703 = vadd.f32 0.0, %v1702
        %1704 = vdwg.mxu0
        %v1705 = vmul.f32 %v1703, 0.25
        %v1706 = vsel %vm800, %v1705, -inf
        %1707 = vmax.xlane.f32.xlu0 %v1706
        %v1708 = vpop.xlane.xlu0 %1707
        %v1709 = vsub.f32 %v1705, %v1708
        %v1710 = vmul.f32 %v1709, 1.442695
        %v1711 = vpow.pop %v1710
        %v1712 = vsel %vm800, %v1711, 0.0
        %1713 = vadd.xlane.f32.xlu0 %v1712
        %v1714 = vpop.xlane.xlu0 %1713
        %v1715 = vrcp.pop %v1714
        %v1716 = vmul.f32 %v1711, %v1715
        %1717 = vrot.lane.b32.xlu0 %v1677, 96
        %v1718 = vpop.permute.xlu0 %1717
        %v1721 = vsel %vm800, %v1716, 0
        %1723 = vmatpush.msra.mxu0 0.0
        %1724 = vmatpush.msra.mxu0 0.0
        %1725 = vmatpush.msra.mxu0 0.0
        %1726 = vmatpush.msra.mxu0 0.0
        %1727 = vmatpush.msra.mxu0 0.0
        %1728 = vmatpush.msra.mxu0 0.0
        %1729 = vmatpush.msra.mxu0 0.0
        %1730 = vmatpush.msra.mxu0 0.0
        %1731 = vmatpush.msra.mxu0 0.0
        %1732 = vmatpush.msra.mxu0 0.0
        %1733 = vmatpush.msra.mxu0 0.0
        %1734 = vmatpush.msra.mxu0 0.0
        %1735 = vmatpush.msra.mxu0 0.0
        %1736 = vmatpush.msra.mxu0 0.0
        %1737 = vmatpush.msra.mxu0 0.0
        %1738 = vmatpush.msra.mxu0 %v1718
        %1739 = vmatmul.f32.gmra.mxu0 %v1721
        %v1740 = vpop.f32.mrf.mxu0
        %v1741 = vadd.f32 0.0, %v1740
        %1742 = vdwg.mxu0
        %1743 = vrot.lane.b32.xlu0 %v1616, 112
        %v1744 = vpop.permute.xlu0 %1743
        %1745 = vrot.lane.b32.xlu0 %v1677, 112
        %v1746 = vpop.permute.xlu0 %1745
        %v1747 = vsel %vm693, %v1744, 0
        %v1749 = vsel %vm693, %v1746, 0
        %1751 = vmatpush.xpose.msra.mxu0 0.0
        %1752 = vmatpush.xpose.msra.mxu0 0.0
        %1753 = vmatpush.xpose.msra.mxu0 0.0
        %1754 = vmatpush.xpose.msra.mxu0 0.0
        %1755 = vmatpush.xpose.msra.mxu0 0.0
        %1756 = vmatpush.xpose.msra.mxu0 0.0
        %1757 = vmatpush.xpose.msra.mxu0 0.0
        %1758 = vmatpush.xpose.msra.mxu0 0.0
        %1759 = vmatpush.xpose.msra.mxu0 0.0
        %1760 = vmatpush.xpose.msra.mxu0 0.0
        %1761 = vmatpush.xpose.msra.mxu0 0.0
        %1762 = vmatpush.xpose.msra.mxu0 0.0
        %1763 = vmatpush.xpose.msra.mxu0 0.0
        %1764 = vmatpush.xpose.msra.mxu0 0.0
        %1765 = vmatpush.xpose.msra.mxu0 0.0
        %1766 = vmatpush.xpose.msra.mxu0 %v1749
        %1767 = vmatmul.f32.gmra.mxu0 %v1747
        %v1768 = vpop.f32.mrf.mxu0
        %v1769 = vadd.f32 0.0, %v1768
        %1770 = vdwg.mxu0
        %v1771 = vmul.f32 %v1769, 0.25
        %v1772 = vsel %vm800, %v1771, -inf
        %1773 = vmax.xlane.f32.xlu0 %v1772
        %v1774 = vpop.xlane.xlu0 %1773
        %v1775 = vsub.f32 %v1771, %v1774
        %v1776 = vmul.f32 %v1775, 1.442695
        %v1777 = vpow.pop %v1776
        %v1778 = vsel %vm800, %v1777, 0.0
        %1779 = vadd.xlane.f32.xlu0 %v1778
        %v1780 = vpop.xlane.xlu0 %1779
        %v1781 = vrcp.pop %v1780
        %v1782 = vmul.f32 %v1777, %v1781
        %1783 = vrot.lane.b32.xlu0 %v1677, 80
        %v1784 = vpop.permute.xlu0 %1783
        %v1787 = vsel %vm800, %v1782, 0
        %1789 = vmatpush.msra.mxu0 0.0
        %1790 = vmatpush.msra.mxu0 0.0
        %1791 = vmatpush.msra.mxu0 0.0
        %1792 = vmatpush.msra.mxu0 0.0
        %1793 = vmatpush.msra.mxu0 0.0
        %1794 = vmatpush.msra.mxu0 0.0
        %1795 = vmatpush.msra.mxu0 0.0
        %1796 = vmatpush.msra.mxu0 0.0
        %1797 = vmatpush.msra.mxu0 0.0
        %1798 = vmatpush.msra.mxu0 0.0
        %1799 = vmatpush.msra.mxu0 0.0
        %1800 = vmatpush.msra.mxu0 0.0
        %1801 = vmatpush.msra.mxu0 0.0
        %1802 = vmatpush.msra.mxu0 0.0
        %1803 = vmatpush.msra.mxu0 0.0
        %1804 = vmatpush.msra.mxu0 %v1784
        %1805 = vmatmul.f32.gmra.mxu0 %v1787
        %v1806 = vpop.f32.mrf.mxu0
        %v1807 = vadd.f32 0.0, %v1806
        %1808 = vdwg.mxu0
        %1810 = vrot.lane.b32.xlu0 %v1807, 16
        %v1811 = vpop.permute.xlu0 %1810
        %v1813 = vsel %vm693, %v1741, %v1811
        %1814 = vrot.lane.b32.xlu0 %v633, 96
        %v1815 = vpop.permute.xlu0 %1814
        %1816 = vrot.lane.b32.xlu0 %v638, 96
        %v1817 = vpop.permute.xlu0 %1816
        %1818 = vrot.lane.b32.xlu0 %v643, 96
        %v1819 = vpop.permute.xlu0 %1818
        %1820 = vrot.lane.b32.xlu0 %v648, 96
        %v1821 = vpop.permute.xlu0 %1820
        %v1827 = vsel %vm893, %v1813, 0
        %1829 = vmatpush.msra.mxu0 0.0
        %1830 = vmatpush.msra.mxu0 0.0
        %1831 = vmatpush.msra.mxu0 0.0
        %1832 = vmatpush.msra.mxu0 0.0
        %1833 = vmatpush.msra.mxu0 0.0
        %1834 = vmatpush.msra.mxu0 0.0
        %1835 = vmatpush.msra.mxu0 0.0
        %1836 = vmatpush.msra.mxu0 0.0
        %1837 = vmatpush.msra.mxu0 0.0
        %1838 = vmatpush.msra.mxu0 0.0
        %1839 = vmatpush.msra.mxu0 0.0
        %1840 = vmatpush.msra.mxu0 0.0
        %1841 = vmatpush.msra.mxu0 %v1821
        %1842 = vmatpush.msra.mxu0 %v1819
        %1843 = vmatpush.msra.mxu0 %v1817
        %1844 = vmatpush.msra.mxu0 %v1815
        %1845 = vmatmul.f32.gmra.mxu0 %v1827
        %v1846 = vpop.f32.mrf.mxu0
        %v1847 = vadd.f32 0.0, %v1846
        %1848 = vdwg.mxu0
        %v1849 = vadd.f32 %v1587, %v1847
        %v1850 = vld [vmem:[#allocation7 + $0x5] sm:$0x1]
        %v1852 = vperm.slane %v1850, 0
        %1853 = vrot.lane.b32.xlu0 %v1852, 84
        %v1854 = vpop.permute.xlu0 %1853
        %v1856 = vadd.f32 %v1849, %v1854
        %v1857 = vld [vmem:[#allocation7 + $0x5] sm:$0x3]
        %v1858 = vsel %vm893, %v1856, 0.0
        %1859 = vadd.xlane.f32.xlu0 %v1858
        %v1860 = vpop.xlane.xlu0 %1859
        %v1861 = vmul.f32 %v1860, %v1109
        %v1862 = vsub.f32 %v1856, %v1861
        %v1863 = vmul.f32 %v1862, %v1862
        %v1864 = vsel %vm893, %v1863, 0.0
        %1865 = vadd.xlane.f32.xlu0 %v1864
        %v1866 = vpop.xlane.xlu0 %1865
        %v1867 = vmul.f32 %v1866, %v1109
        %v1868 = vadd.f32 %v1867, 1e-05
        %v1869 = vrsqrt.pop %v1868
        %v1870 = vmul.f32 %v1869, %v1868
        %v1871 = vmul.f32 %v1870, %v1869
        %v1872 = vmul.f32 0.5, %v1871
        %v1873 = vsub.f32 1.5, %v1872
        %v1874 = vmul.f32 %v1869, %v1873
        %vm1875 = vweird.f32 %v1868
        %vm1876 = vweird.f32 %v1869
        %vm1877 = vmor %vm1875, %vm1876
        %v1878 = vsel %vm1877, %v1869, %v1874
        %v1879 = vmul.f32 %v1862, %v1878
        %1880 = vrot.lane.b32.xlu0 %v1852, 52
        %v1881 = vpop.permute.xlu0 %1880
        %v1883 = vmul.f32 %v1879, %v1881
        %v1885 = vperm.slane %v1857, 0
        %v1886 = vperm.slane %v1857, 1
        %1887 = vrot.lane.b32.xlu0 %v1885, 20
        %v1888 = vpop.permute.xlu0 %1887
        %1889 = vrot.lane.b32.xlu0 %v1886, 20
        %v1890 = vpop.permute.xlu0 %1889
        %v1891 = vsel %vm1153, %v1888, %v1890
        %v1893 = vadd.f32 %v1883, %v1891
        %v1894 = vld [vmem:[#allocation7 + $0x6] sm:$0x1]
        %v1896 = vperm.slane %v1894, 0
        %1897 = vrot.lane.b32.xlu0 %v633, 64
        %v1898 = vpop.permute.xlu0 %1897
        %1899 = vrot.lane.b32.xlu0 %v638, 64
        %v1900 = vpop.permute.xlu0 %1899
        %1901 = vrot.lane.b32.xlu0 %v643, 64
        %v1902 = vpop.permute.xlu0 %1901
        %1903 = vrot.lane.b32.xlu0 %v648, 64
        %v1904 = vpop.permute.xlu0 %1903
        %1909 = vrot.lane.b32.xlu0 %v1896, 116
        %v1910 = vpop.permute.xlu0 %1909
        %v1913 = vsel %vm893, %v1893, 0
        %1915 = vmatpush.msra.mxu0 0.0
        %1916 = vmatpush.msra.mxu0 0.0
        %1917 = vmatpush.msra.mxu0 0.0
        %1918 = vmatpush.msra.mxu0 0.0
        %1919 = vmatpush.msra.mxu0 0.0
        %1920 = vmatpush.msra.mxu0 0.0
        %1921 = vmatpush.msra.mxu0 0.0
        %1922 = vmatpush.msra.mxu0 0.0
        %1923 = vmatpush.msra.mxu0 0.0
        %1924 = vmatpush.msra.mxu0 0.0
        %1925 = vmatpush.msra.mxu0 0.0
        %1926 = vmatpush.msra.mxu0 0.0
        %1927 = vmatpush.msra.mxu0 %v1904
        %1928 = vmatpush.msra.mxu0 %v1902
        %1929 = vmatpush.msra.mxu0 %v1900
        %1930 = vmatpush.msra.mxu0 %v1898
        %1931 = vmatmul.f32.gmra.mxu0 %v1913
        %v1932 = vpop.f32.mrf.mxu0
        %v1933 = vadd.f32 %v1910, %v1932
        %1934 = vdwg.mxu0
        %v1935 = vmax.f32 %v1933, 0.0
        %1944 = vrot.lane.b32.xlu0 %v1137, 96
        %v1945 = vpop.permute.xlu0 %1944
        %1946 = vrot.lane.b32.xlu0 %v1138, 96
        %v1947 = vpop.permute.xlu0 %1946
        %1948 = vrot.lane.b32.xlu0 %v1139, 96
        %v1949 = vpop.permute.xlu0 %1948
        %1950 = vrot.lane.b32.xlu0 %v1140, 96
        %v1951 = vpop.permute.xlu0 %1950
        %1952 = vrot.lane.b32.xlu0 %v1141, 96
        %v1953 = vpop.permute.xlu0 %1952
        %1954 = vrot.lane.b32.xlu0 %v1142, 96
        %v1955 = vpop.permute.xlu0 %1954
        %1956 = vrot.lane.b32.xlu0 %v1143, 96
        %v1957 = vpop.permute.xlu0 %1956
        %1958 = vrot.lane.b32.xlu0 %v1144, 96
        %v1959 = vpop.permute.xlu0 %1958
        %1968 = vrot.lane.b32.xlu0 %v1896, 52
        %v1969 = vpop.permute.xlu0 %1968
        %v1972 = vsel %vm1186, %v1935, 0
        %1974 = vmatpush.msra.mxu0 0.0
        %1975 = vmatpush.msra.mxu0 0.0
        %1976 = vmatpush.msra.mxu0 0.0
        %1977 = vmatpush.msra.mxu0 0.0
        %1978 = vmatpush.msra.mxu0 0.0
        %1979 = vmatpush.msra.mxu0 0.0
        %1980 = vmatpush.msra.mxu0 0.0
        %1981 = vmatpush.msra.mxu0 0.0
        %1982 = vmatpush.msra.mxu0 %v1959
        %1983 = vmatpush.msra.mxu0 %v1957
        %1984 = vmatpush.msra.mxu0 %v1955
        %1985 = vmatpush.msra.mxu0 %v1953
        %1986 = vmatpush.msra.mxu0 %v1951
        %1987 = vmatpush.msra.mxu0 %v1949
        %1988 = vmatpush.msra.mxu0 %v1947
        %1989 = vmatpush.msra.mxu0 %v1945
        %1990 = vmatmul.f32.gmra.mxu0 %v1972
        %v1991 = vpop.f32.mrf.mxu0
        %v1992 = vadd.f32 %v1969, %v1991
        %1993 = vdwg.mxu0
        %v1994 = vadd.f32 %v1893, %v1992
        %v1995 = vld [vmem:[#allocation7 + $0x6] sm:$0x3]
        %v1996 = vld [vmem:[#allocation7 + $0x7] sm:$0x1]
        %v1997 = vsel %vm893, %v1994, 0.0
        %1998 = vadd.xlane.f32.xlu0 %v1997
        %v1999 = vpop.xlane.xlu0 %1998
        %v2000 = vmul.f32 %v1999, %v1109
        %v2001 = vsub.f32 %v1994, %v2000
        %v2002 = vmul.f32 %v2001, %v2001
        %v2003 = vsel %vm893, %v2002, 0.0
        %2004 = vadd.xlane.f32.xlu0 %v2003
        %v2005 = vpop.xlane.xlu0 %2004
        %v2006 = vmul.f32 %v2005, %v1109
        %v2007 = vadd.f32 %v2006, 1e-05
        %v2008 = vrsqrt.pop %v2007
        %v2009 = vmul.f32 %v2008, %v2007
        %v2010 = vmul.f32 %v2009, %v2008
        %v2011 = vmul.f32 0.5, %v2010
        %v2012 = vsub.f32 1.5, %v2011
        %v2013 = vmul.f32 %v2008, %v2012
        %vm2014 = vweird.f32 %v2007
        %vm2015 = vweird.f32 %v2008
        %vm2016 = vmor %vm2014, %vm2015
        %v2017 = vsel %vm2016, %v2008, %v2013
        %v2018 = vmul.f32 %v2001, %v2017
        %v2020 = vperm.slane %v1995, 0
        %v2021 = vperm.slane %v1995, 1
        %2022 = vrot.lane.b32.xlu0 %v2020, 20
        %v2023 = vpop.permute.xlu0 %2022
        %2024 = vrot.lane.b32.xlu0 %v2021, 20
        %v2025 = vpop.permute.xlu0 %2024
        %v2026 = vsel %vm1153, %v2023, %v2025
        %v2028 = vmul.f32 %v2018, %v2026
        %v2030 = vperm.slane %v1996, 0
        %2031 = vrot.lane.b32.xlu0 %v2030, 116
        %v2032 = vpop.permute.xlu0 %2031
        %v2034 = vadd.f32 %v2028, %v2032
        %2035 = vrot.lane.b32.xlu0 %v2030, 84
        %v2036 = vpop.permute.xlu0 %2035
        %v2039 = vsel %vm893, %v2034, 0
        %2041 = vmatpush.msra.mxu0 0.0
        %2042 = vmatpush.msra.mxu0 0.0
        %2043 = vmatpush.msra.mxu0 0.0
        %2044 = vmatpush.msra.mxu0 0.0
        %2045 = vmatpush.msra.mxu0 0.0
        %2046 = vmatpush.msra.mxu0 0.0
        %2047 = vmatpush.msra.mxu0 0.0
        %2048 = vmatpush.msra.mxu0 0.0
        %2049 = vmatpush.msra.mxu0 0.0
        %2050 = vmatpush.msra.mxu0 0.0
        %2051 = vmatpush.msra.mxu0 0.0
        %2052 = vmatpush.msra.mxu0 0.0
        %2053 = vmatpush.msra.mxu0 %v649
        %2054 = vmatpush.msra.mxu0 %v644
        %2055 = vmatpush.msra.mxu0 %v639
        %2056 = vmatpush.msra.mxu0 %v634
        %2057 = vmatmul.f32.gmra.mxu0 %v2039
        %v2058 = vpop.f32.mrf.mxu0
        %v2059 = vadd.f32 %v2036, %v2058
        %2060 = vdwg.mxu0
        %2061 = vst.msk [vmem:[%s629] sm:$0xff] %vm659, %v2059
        %p2062 = scmp.lt.s32.totalorder %s30, 1
        %s2063 = scalar_select %p2062, %s30, 1
        %s2064 = smul.addr %s2063, 8
        %s2065 = scalar_lea.vmem %s14, %s2064
        %p2066 = scmp.lt.s32.totalorder %s30, 1
        %s2067 = scalar_select %p2066, %s30, 1
        %s2068 = smul.addr %s2067, 8
        %s2069 = scalar_lea.vmem %s15, %s2068
        // Predicated region
        $region93: #{_lambda_.1} parent=75 // pred_check
          %p2070 = pneg %p367
        $region94: #{_lambda_.1} parent=75 // pred_check_branch
          %2072 = sbr.rel (%p2070) target = $region96
        $region95: #{_lambda_.1} parent=75 // pred_region
          _
        $region96: #{_lambda_.1} parent=75 // pred_fallthru
          _
        // Predicated region
        $region97: #{_lambda_.1} parent=75 // pred_check
          %p2073 = pneg %p393
        $region98: #{_lambda_.1} parent=75 // pred_check_branch
          %2075 = sbr.rel (%p2073) target = $region100
        $region99: #{_lambda_.1} parent=75 // pred_region
          _
        $region100: #{_lambda_.1} parent=75 // pred_fallthru
          _
      $region76: #{_lambda_.1} parent=5 // pred_fallthru
        _
      %p2076 = scmp.le.s32.totalorder 2, %s25
      // Predicated region
      $region101: #{_lambda_.1} parent=5 // pred_check
        %p2077 = pneg %p2076
      $region102: #{_lambda_.1} parent=5 // pred_check_branch
        %2079 = sbr.rel (%p2077) target = $region104
      $region103: #{_lambda_.1} parent=5 // pred_region
        %s2080 = ssub.s32 %s25, 2
        // Predicated region
        $region105: #{_lambda_.1} parent=103 // pred_check
          %p2081 = pneg %p373
        $region106: #{_lambda_.1} parent=103 // pred_check_branch
          %2083 = sbr.rel (%p2081) target = $region108
        $region107: #{_lambda_.1} parent=103 // pred_region
          %p2084 = scmp.lt.s32.totalorder %s31, 1
          %s2085 = scalar_select %p2084, %s31, 1
          %s2086 = smul.addr %s2085, 8
          %s2087 = scalar_lea.vmem %s14, %s2086
        $region108: #{_lambda_.1} parent=103 // pred_fallthru
          _
        // Predicated region
        $region109: #{_lambda_.1} parent=103 // pred_check
          %p2088 = pneg %p399
        $region110: #{_lambda_.1} parent=103 // pred_check_branch
          %2090 = sbr.rel (%p2088) target = $region112
        $region111: #{_lambda_.1} parent=103 // pred_region
          %p2091 = scmp.lt.s32.totalorder %s31, 1
          %s2092 = scalar_select %p2091, %s31, 1
          %s2093 = smul.addr %s2092, 8
          %s2094 = scalar_lea.vmem %s15, %s2093
        $region112: #{_lambda_.1} parent=103 // pred_fallthru
          _
      $region104: #{_lambda_.1} parent=5 // pred_fallthru
        _
    $region6: #{_lambda_.1} parent=1 // loop_footer
      %s29 = sadd.s32 1, %s25
    $region7: #{_lambda_.1} parent=1 // loop_footer_branch
      %24 = sbr.rel target = $region3
    $region8: #{_lambda_.1} parent=1 // loop_exit
      _
    %2095 = vsyncpa [#allocation3], 1
    %s2096 = scalar_lea.sflag [#allocation3], 1
    %2097 = vsyncpa %s2096, 1
    %2098 = vsyncpa [#allocation5], 1
    %2099 = vsyncpa [#allocation8], 1

</llo_original>
